<compile_context>
chip_gen: v5e
topology: v5e:2x2
jax: 0.10.0
libtpu: 0.0.40
codegen_flags: <defaults>
</compile_context>

<pallas_src>
import functools

import jax
import jax.numpy as jnp
import numpy as np
from jax.experimental import pallas as pl
from jax.experimental.pallas import tpu as pltpu


def gru_kernel(x_ref, wih_ref, whh_ref, bih_ref, bhhn_ref, out_ref, gi_ref,
               *, T, Bp, Hp):
    # ---- Phase 1: batched non-recurrent input projection (one MXU matmul) ----
    gi_ref[...] = (
        jnp.dot(x_ref[...], wih_ref[...], preferred_element_type=jnp.float32)
        + bih_ref[...])                                        # (T*Bp, 3*Hp)

    # Hoisted broadcast of the n-gate hidden bias (JAX does not CSE broadcasts).
    bhh_n = jnp.broadcast_to(bhhn_ref[...], (Bp, Hp))          # (Bp, Hp)

    # ---- Phase 2: sequential recurrence; only h @ whh stays in the loop ----
    def step(t, h):
        base = pl.multiple_of(t * Bp, Bp)
        gi = gi_ref[pl.ds(base, Bp), :]                        # (Bp, 3*Hp)
        gh = jnp.dot(h, whh_ref[...], preferred_element_type=jnp.float32)
        # gate slices are 128-lane aligned (Hp == 128*k) -> no masked selects
        r = jax.nn.sigmoid(gi[:, 0 * Hp:1 * Hp] + gh[:, 0 * Hp:1 * Hp])
        z = jax.nn.sigmoid(gi[:, 1 * Hp:2 * Hp] + gh[:, 1 * Hp:2 * Hp])
        n = jnp.tanh(gi[:, 2 * Hp:3 * Hp] + r * (gh[:, 2 * Hp:3 * Hp] + bhh_n))
        h_new = (1.0 - z) * n + z * h
        out_ref[pl.ds(base, Bp), :] = h_new                    # dense (8,128) store
        return h_new

    h0 = jnp.zeros((Bp, Hp), jnp.float32)
    jax.lax.fori_loop(0, T, step, h0, unroll=True)


def _round_up(x, m):
    return (x + m - 1) // m * m


def gru_forward(x_tbn, params):
    """x_tbn: (T, B, nIn) float32 — same layout nn.GRU(batch_first=False) expects."""
    x = jnp.asarray(x_tbn, jnp.float32)
    T, B, nIn = x.shape
    wih, whh = params["wih"], params["whh"]     # (3H, nIn), (3H, H), gate order [r,z,n]
    bih, bhh = params["bih"], params["bhh"]     # (3H,), (3H,)
    H = whh.shape[1]

    Bp = _round_up(max(B, 8), 8)        # fill all 8 sublanes of each vreg
    Hp = _round_up(max(H, 128), 128)    # each gate gets full 128-lane block(s)

    # --- glue: pre-transpose + zero-pad weights into gate-lane-aligned layout ---
    def gate_pad_cols(w_t):             # w_t: (in_dim, 3H) -> (in_dim, 3*Hp)
        in_dim = w_t.shape[0]
        out = jnp.zeros((in_dim, 3 * Hp), jnp.float32)
        for g in range(3):
            out = out.at[:, g * Hp: g * Hp + H].set(w_t[:, g * H:(g + 1) * H])
        return out

    wih_p = gate_pad_cols(wih.T)                                          # (nIn, 3*Hp)
    whh_p = jnp.zeros((Hp, 3 * Hp), jnp.float32).at[:H, :].set(gate_pad_cols(whh.T))

    # fold b_hh of the r/z gates into b_ih; keep only b_hh(n) for inside the loop
    bfold = jnp.concatenate([bih[:2 * H] + bhh[:2 * H], bih[2 * H:]])     # (3H,)
    bih_p = gate_pad_cols(bfold.reshape(1, 3 * H))                        # (1, 3*Hp)
    bhhn_p = jnp.zeros((1, Hp), jnp.float32).at[:, :H].set(bhh[2 * H:].reshape(1, H))

    # pad batch to Bp sublanes; flatten time into rows: (T*Bp, nIn)
    x_p = jnp.zeros((T, Bp, nIn), jnp.float32).at[:, :B, :].set(x)
    x_p = x_p.reshape(T * Bp, nIn)

    kernel = functools.partial(gru_kernel, T=T, Bp=Bp, Hp=Hp)
    vmem = pl.BlockSpec(memory_space=pltpu.MemorySpace.VMEM)

    out = pl.pallas_call(
        kernel,
        out_shape=jax.ShapeDtypeStruct((T * Bp, Hp), jnp.float32),
        in_specs=[vmem] * 5,
        out_specs=vmem,
        scratch_shapes=[pltpu.VMEM((T * Bp, 3 * Hp), jnp.float32)],  # staged gi_all
    )(x_p, wih_p, whh_p, bih_p, bhhn_p)

    return out.reshape(T, Bp, Hp)[:, :B, :H]        # (T, B, H) == `recurrent`


# ---------------- reference (plain JAX) for numerical sanity check ----------------
def gru_ref(x_tbn, params):
    x = jnp.asarray(x_tbn, jnp.float32)
    T, B, _ = x.shape
    wih, whh = params["wih"], params["whh"]
    bih, bhh = params["bih"], params["bhh"]
    H = whh.shape[1]
    h = jnp.zeros((B, H), jnp.float32)
    outs = []
    for t in range(T):
        gi = x[t] @ wih.T + bih
        gh = h @ whh.T + bhh
        r = jax.nn.sigmoid(gi[:, :H] + gh[:, :H])
        z = jax.nn.sigmoid(gi[:, H:2 * H] + gh[:, H:2 * H])
        n = jnp.tanh(gi[:, 2 * H:] + r * gh[:, 2 * H:])
        h = (1.0 - z) * n + z * h
        outs.append(h)
    return jnp.stack(outs)                           # (T, B, H)


def init_params(key, n_in, hidden):
    ks = jax.random.split(key, 4)
    bnd = 1.0 / np.sqrt(hidden)
    u = lambda k, s: jax.random.uniform(k, s, jnp.float32, -bnd, bnd)
    return dict(
        wih=u(ks[0], (3 * hidden, n_in)),
        whh=u(ks[1], (3 * hidden, hidden)),
        bih=u(ks[2], (3 * hidden,)),
        bhh=u(ks[3], (3 * hidden,)),
    )


if __name__ == "__main__":
    # TODO(synk): self.embedding (nn.Linear) is defined but never used in forward()
    # (forward returns the raw GRU outputs), so it is intentionally not implemented.
    T, B, N_IN, HIDDEN = 8, 2, 7, 32
    key = jax.random.PRNGKey(0)
    kx, kp = jax.random.split(key)
    x = jax.random.normal(kx, (T, B, N_IN), jnp.float32)   # (seq, batch, nIn)
    params = init_params(kp, N_IN, HIDDEN)

    out = jax.block_until_ready(gru_forward(x, params))
    ref = gru_ref(x, params)
    assert out.shape == (T, B, HIDDEN), out.shape
    np.testing.assert_allclose(np.asarray(out), np.asarray(ref), atol=1e-4, rtol=1e-4)

    print("KERNEL_OK")
</pallas_src>

<mosaic_0001>
module attributes {stable_mosaic.version = 11 : i64} {
  func.func @gru_kernel(%arg0: memref<64x7xf32, #tpu.memory_space<vmem>>, %arg1: memref<7x384xf32, #tpu.memory_space<vmem>>, %arg2: memref<128x384xf32, #tpu.memory_space<vmem>>, %arg3: memref<1x384xf32, #tpu.memory_space<vmem>>, %arg4: memref<1x128xf32, #tpu.memory_space<vmem>>, %arg5: memref<64x128xf32, #tpu.memory_space<vmem>>, %arg6: memref<64x384xf32, #tpu.memory_space<vmem>>) attributes {dimension_semantics = [], scalar_prefetch = 0 : i64, scratch_operands = 1 : i64, tpu.core_type = #tpu.core_type<tc>} {
    %c0 = arith.constant 0 : index
    %c0_0 = arith.constant 0 : index
    %0 = vector.load %arg0[%c0, %c0_0] : memref<64x7xf32, #tpu.memory_space<vmem>>, vector<64x7xf32>
    %c0_1 = arith.constant 0 : index
    %c0_2 = arith.constant 0 : index
    %1 = vector.load %arg1[%c0_1, %c0_2] : memref<7x384xf32, #tpu.memory_space<vmem>>, vector<7x384xf32>
    %cst = arith.constant dense<0.000000e+00> : vector<64x384xf32>
    %2 = tpu.matmul %0, %1, %cst {dimension_numbers = #tpu.dot_dimension_numbers<[1], [0], [0], [1], [0, 0, 1, 1], [], []>} : vector<64x7xf32>, vector<7x384xf32>, vector<64x384xf32> -> vector<64x384xf32>
    %c0_3 = arith.constant 0 : index
    %c0_4 = arith.constant 0 : index
    %3 = vector.load %arg3[%c0_3, %c0_4] : memref<1x384xf32, #tpu.memory_space<vmem>>, vector<1x384xf32>
    %4 = vector.broadcast %3 : vector<1x384xf32> to vector<64x384xf32>
    %5 = arith.addf %2, %4 : vector<64x384xf32>
    %c0_5 = arith.constant 0 : index
    %c0_6 = arith.constant 0 : index
    %6 = vector.load %arg6[%c0_5, %c0_6] : memref<64x384xf32, #tpu.memory_space<vmem>>, vector<64x384xf32>
    tpu.vector_store %arg6[%c0_5, %c0_6], %5 {strides = array<i32>} : memref<64x384xf32, #tpu.memory_space<vmem>>, vector<64x384xf32>,
    %c0_7 = arith.constant 0 : index
    %c0_8 = arith.constant 0 : index
    %7 = vector.load %arg4[%c0_7, %c0_8] : memref<1x128xf32, #tpu.memory_space<vmem>>, vector<1x128xf32>
    %8 = vector.shape_cast %7 : vector<1x128xf32> to vector<1x128xf32>
    %9 = vector.broadcast %8 : vector<1x128xf32> to vector<8x128xf32>
    %cst_9 = arith.constant 0.000000e+00 : f32
    %10 = vector.broadcast %cst_9 : f32 to vector<8x128xf32>
    %c0_i32 = arith.constant 0 : i32
    %c8_i32 = arith.constant 8 : i32
    %11 = arith.muli %c0_i32, %c8_i32 : i32
    %12 = tpu.assume_multiple %11, 8 : i32
    %13 = arith.index_cast %12 : i32 to index
    %c0_10 = arith.constant 0 : index
    %14 = vector.load %arg6[%13, %c0_10] : memref<64x384xf32, #tpu.memory_space<vmem>>, vector<8x384xf32>
    %c0_11 = arith.constant 0 : index
    %c0_12 = arith.constant 0 : index
    %15 = vector.load %arg2[%c0_11, %c0_12] : memref<128x384xf32, #tpu.memory_space<vmem>>, vector<128x384xf32>
    %cst_13 = arith.constant dense<0.000000e+00> : vector<8x384xf32>
    %16 = tpu.matmul %10, %15, %cst_13 {dimension_numbers = #tpu.dot_dimension_numbers<[1], [0], [0], [1], [0, 0, 1, 1], [], []>} : vector<8x128xf32>, vector<128x384xf32>, vector<8x384xf32> -> vector<8x384xf32>
    %17 = vector.extract_strided_slice %14 {offsets = [0, 0], sizes = [8, 128], strides = [1, 1]} : vector<8x384xf32> to vector<8x128xf32>
    %18 = vector.extract_strided_slice %16 {offsets = [0, 0], sizes = [8, 128], strides = [1, 1]} : vector<8x384xf32> to vector<8x128xf32>
    %19 = arith.addf %17, %18 : vector<8x128xf32>
    %20 = arith.negf %19 : vector<8x128xf32>
    %21 = math.exp %20 : vector<8x128xf32>
    %cst_14 = arith.constant 1.000000e+00 : f32
    %22 = vector.broadcast %cst_14 : f32 to vector<8x128xf32>
    %23 = arith.addf %22, %21 : vector<8x128xf32>
    %24 = arith.divf %22, %23 : vector<8x128xf32>
    %25 = vector.extract_strided_slice %14 {offsets = [0, 128], sizes = [8, 128], strides = [1, 1]} : vector<8x384xf32> to vector<8x128xf32>
    %26 = vector.extract_strided_slice %16 {offsets = [0, 128], sizes = [8, 128], strides = [1, 1]} : vector<8x384xf32> to vector<8x128xf32>
    %27 = arith.addf %25, %26 : vector<8x128xf32>
    %28 = arith.negf %27 : vector<8x128xf32>
    %29 = math.exp %28 : vector<8x128xf32>
    %cst_15 = arith.constant 1.000000e+00 : f32
    %30 = vector.broadcast %cst_15 : f32 to vector<8x128xf32>
    %31 = arith.addf %30, %29 : vector<8x128xf32>
    %32 = arith.divf %30, %31 : vector<8x128xf32>
    %33 = vector.extract_strided_slice %14 {offsets = [0, 256], sizes = [8, 128], strides = [1, 1]} : vector<8x384xf32> to vector<8x128xf32>
    %34 = vector.extract_strided_slice %16 {offsets = [0, 256], sizes = [8, 128], strides = [1, 1]} : vector<8x384xf32> to vector<8x128xf32>
    %35 = arith.addf %34, %9 : vector<8x128xf32>
    %36 = arith.mulf %24, %35 : vector<8x128xf32>
    %37 = arith.addf %33, %36 : vector<8x128xf32>
    %38 = math.tanh %37 : vector<8x128xf32>
    %cst_16 = arith.constant 1.000000e+00 : f32
    %39 = vector.broadcast %cst_16 : f32 to vector<8x128xf32>
    %40 = arith.subf %39, %32 : vector<8x128xf32>
    %41 = arith.mulf %40, %38 : vector<8x128xf32>
    %42 = arith.mulf %32, %10 : vector<8x128xf32>
    %43 = arith.addf %41, %42 : vector<8x128xf32>
    %44 = arith.index_cast %12 : i32 to index
    %c0_17 = arith.constant 0 : index
    %45 = vector.load %arg5[%44, %c0_17] : memref<64x128xf32, #tpu.memory_space<vmem>>, vector<8x128xf32>
    tpu.vector_store %arg5[%44, %c0_17], %43 {strides = array<i32>} : memref<64x128xf32, #tpu.memory_space<vmem>>, vector<8x128xf32>,
    %c1_i32 = arith.constant 1 : i32
    %c8_i32_18 = arith.constant 8 : i32
    %46 = arith.muli %c1_i32, %c8_i32_18 : i32
    %47 = tpu.assume_multiple %46, 8 : i32
    %48 = arith.index_cast %47 : i32 to index
    %c0_19 = arith.constant 0 : index
    %49 = vector.load %arg6[%48, %c0_19] : memref<64x384xf32, #tpu.memory_space<vmem>>, vector<8x384xf32>
    %c0_20 = arith.constant 0 : index
    %c0_21 = arith.constant 0 : index
    %50 = vector.load %arg2[%c0_20, %c0_21] : memref<128x384xf32, #tpu.memory_space<vmem>>, vector<128x384xf32>
    %cst_22 = arith.constant dense<0.000000e+00> : vector<8x384xf32>
    %51 = tpu.matmul %43, %50, %cst_22 {dimension_numbers = #tpu.dot_dimension_numbers<[1], [0], [0], [1], [0, 0, 1, 1], [], []>} : vector<8x128xf32>, vector<128x384xf32>, vector<8x384xf32> -> vector<8x384xf32>
    %52 = vector.extract_strided_slice %49 {offsets = [0, 0], sizes = [8, 128], strides = [1, 1]} : vector<8x384xf32> to vector<8x128xf32>
    %53 = vector.extract_strided_slice %51 {offsets = [0, 0], sizes = [8, 128], strides = [1, 1]} : vector<8x384xf32> to vector<8x128xf32>
    %54 = arith.addf %52, %53 : vector<8x128xf32>
    %55 = arith.negf %54 : vector<8x128xf32>
    %56 = math.exp %55 : vector<8x128xf32>
    %cst_23 = arith.constant 1.000000e+00 : f32
    %57 = vector.broadcast %cst_23 : f32 to vector<8x128xf32>
    %58 = arith.addf %57, %56 : vector<8x128xf32>
    %59 = arith.divf %57, %58 : vector<8x128xf32>
    %60 = vector.extract_strided_slice %49 {offsets = [0, 128], sizes = [8, 128], strides = [1, 1]} : vector<8x384xf32> to vector<8x128xf32>
    %61 = vector.extract_strided_slice %51 {offsets = [0, 128], sizes = [8, 128], strides = [1, 1]} : vector<8x384xf32> to vector<8x128xf32>
    %62 = arith.addf %60, %61 : vector<8x128xf32>
    %63 = arith.negf %62 : vector<8x128xf32>
    %64 = math.exp %63 : vector<8x128xf32>
    %cst_24 = arith.constant 1.000000e+00 : f32
    %65 = vector.broadcast %cst_24 : f32 to vector<8x128xf32>
    %66 = arith.addf %65, %64 : vector<8x128xf32>
    %67 = arith.divf %65, %66 : vector<8x128xf32>
    %68 = vector.extract_strided_slice %49 {offsets = [0, 256], sizes = [8, 128], strides = [1, 1]} : vector<8x384xf32> to vector<8x128xf32>
    %69 = vector.extract_strided_slice %51 {offsets = [0, 256], sizes = [8, 128], strides = [1, 1]} : vector<8x384xf32> to vector<8x128xf32>
    %70 = arith.addf %69, %9 : vector<8x128xf32>
    %71 = arith.mulf %59, %70 : vector<8x128xf32>
    %72 = arith.addf %68, %71 : vector<8x128xf32>
    %73 = math.tanh %72 : vector<8x128xf32>
    %cst_25 = arith.constant 1.000000e+00 : f32
    %74 = vector.broadcast %cst_25 : f32 to vector<8x128xf32>
    %75 = arith.subf %74, %67 : vector<8x128xf32>
    %76 = arith.mulf %75, %73 : vector<8x128xf32>
    %77 = arith.mulf %67, %43 : vector<8x128xf32>
    %78 = arith.addf %76, %77 : vector<8x128xf32>
    %79 = arith.index_cast %47 : i32 to index
    %c0_26 = arith.constant 0 : index
    %80 = vector.load %arg5[%79, %c0_26] : memref<64x128xf32, #tpu.memory_space<vmem>>, vector<8x128xf32>
    tpu.vector_store %arg5[%79, %c0_26], %78 {strides = array<i32>} : memref<64x128xf32, #tpu.memory_space<vmem>>, vector<8x128xf32>,
    %c2_i32 = arith.constant 2 : i32
    %c8_i32_27 = arith.constant 8 : i32
    %81 = arith.muli %c2_i32, %c8_i32_27 : i32
    %82 = tpu.assume_multiple %81, 8 : i32
    %83 = arith.index_cast %82 : i32 to index
    %c0_28 = arith.constant 0 : index
    %84 = vector.load %arg6[%83, %c0_28] : memref<64x384xf32, #tpu.memory_space<vmem>>, vector<8x384xf32>
    %c0_29 = arith.constant 0 : index
    %c0_30 = arith.constant 0 : index
    %85 = vector.load %arg2[%c0_29, %c0_30] : memref<128x384xf32, #tpu.memory_space<vmem>>, vector<128x384xf32>
    %cst_31 = arith.constant dense<0.000000e+00> : vector<8x384xf32>
    %86 = tpu.matmul %78, %85, %cst_31 {dimension_numbers = #tpu.dot_dimension_numbers<[1], [0], [0], [1], [0, 0, 1, 1], [], []>} : vector<8x128xf32>, vector<128x384xf32>, vector<8x384xf32> -> vector<8x384xf32>
    %87 = vector.extract_strided_slice %84 {offsets = [0, 0], sizes = [8, 128], strides = [1, 1]} : vector<8x384xf32> to vector<8x128xf32>
    %88 = vector.extract_strided_slice %86 {offsets = [0, 0], sizes = [8, 128], strides = [1, 1]} : vector<8x384xf32> to vector<8x128xf32>
    %89 = arith.addf %87, %88 : vector<8x128xf32>
    %90 = arith.negf %89 : vector<8x128xf32>
    %91 = math.exp %90 : vector<8x128xf32>
    %cst_32 = arith.constant 1.000000e+00 : f32
    %92 = vector.broadcast %cst_32 : f32 to vector<8x128xf32>
    %93 = arith.addf %92, %91 : vector<8x128xf32>
    %94 = arith.divf %92, %93 : vector<8x128xf32>
    %95 = vector.extract_strided_slice %84 {offsets = [0, 128], sizes = [8, 128], strides = [1, 1]} : vector<8x384xf32> to vector<8x128xf32>
    %96 = vector.extract_strided_slice %86 {offsets = [0, 128], sizes = [8, 128], strides = [1, 1]} : vector<8x384xf32> to vector<8x128xf32>
    %97 = arith.addf %95, %96 : vector<8x128xf32>
    %98 = arith.negf %97 : vector<8x128xf32>
    %99 = math.exp %98 : vector<8x128xf32>
    %cst_33 = arith.constant 1.000000e+00 : f32
    %100 = vector.broadcast %cst_33 : f32 to vector<8x128xf32>
    %101 = arith.addf %100, %99 : vector<8x128xf32>
    %102 = arith.divf %100, %101 : vector<8x128xf32>
    %103 = vector.extract_strided_slice %84 {offsets = [0, 256], sizes = [8, 128], strides = [1, 1]} : vector<8x384xf32> to vector<8x128xf32>
    %104 = vector.extract_strided_slice %86 {offsets = [0, 256], sizes = [8, 128], strides = [1, 1]} : vector<8x384xf32> to vector<8x128xf32>
    %105 = arith.addf %104, %9 : vector<8x128xf32>
    %106 = arith.mulf %94, %105 : vector<8x128xf32>
    %107 = arith.addf %103, %106 : vector<8x128xf32>
    %108 = math.tanh %107 : vector<8x128xf32>
    %cst_34 = arith.constant 1.000000e+00 : f32
    %109 = vector.broadcast %cst_34 : f32 to vector<8x128xf32>
    %110 = arith.subf %109, %102 : vector<8x128xf32>
    %111 = arith.mulf %110, %108 : vector<8x128xf32>
    %112 = arith.mulf %102, %78 : vector<8x128xf32>
    %113 = arith.addf %111, %112 : vector<8x128xf32>
    %114 = arith.index_cast %82 : i32 to index
    %c0_35 = arith.constant 0 : index
    %115 = vector.load %arg5[%114, %c0_35] : memref<64x128xf32, #tpu.memory_space<vmem>>, vector<8x128xf32>
    tpu.vector_store %arg5[%114, %c0_35], %113 {strides = array<i32>} : memref<64x128xf32, #tpu.memory_space<vmem>>, vector<8x128xf32>,
    %c3_i32 = arith.constant 3 : i32
    %c8_i32_36 = arith.constant 8 : i32
    %116 = arith.muli %c3_i32, %c8_i32_36 : i32
    %117 = tpu.assume_multiple %116, 8 : i32
    %118 = arith.index_cast %117 : i32 to index
    %c0_37 = arith.constant 0 : index
    %119 = vector.load %arg6[%118, %c0_37] : memref<64x384xf32, #tpu.memory_space<vmem>>, vector<8x384xf32>
    %c0_38 = arith.constant 0 : index
    %c0_39 = arith.constant 0 : index
    %120 = vector.load %arg2[%c0_38, %c0_39] : memref<128x384xf32, #tpu.memory_space<vmem>>, vector<128x384xf32>
    %cst_40 = arith.constant dense<0.000000e+00> : vector<8x384xf32>
    %121 = tpu.matmul %113, %120, %cst_40 {dimension_numbers = #tpu.dot_dimension_numbers<[1], [0], [0], [1], [0, 0, 1, 1], [], []>} : vector<8x128xf32>, vector<128x384xf32>, vector<8x384xf32> -> vector<8x384xf32>
    %122 = vector.extract_strided_slice %119 {offsets = [0, 0], sizes = [8, 128], strides = [1, 1]} : vector<8x384xf32> to vector<8x128xf32>
    %123 = vector.extract_strided_slice %121 {offsets = [0, 0], sizes = [8, 128], strides = [1, 1]} : vector<8x384xf32> to vector<8x128xf32>
    %124 = arith.addf %122, %123 : vector<8x128xf32>
    %125 = arith.negf %124 : vector<8x128xf32>
    %126 = math.exp %125 : vector<8x128xf32>
    %cst_41 = arith.constant 1.000000e+00 : f32
    %127 = vector.broadcast %cst_41 : f32 to vector<8x128xf32>
    %128 = arith.addf %127, %126 : vector<8x128xf32>
    %129 = arith.divf %127, %128 : vector<8x128xf32>
    %130 = vector.extract_strided_slice %119 {offsets = [0, 128], sizes = [8, 128], strides = [1, 1]} : vector<8x384xf32> to vector<8x128xf32>
    %131 = vector.extract_strided_slice %121 {offsets = [0, 128], sizes = [8, 128], strides = [1, 1]} : vector<8x384xf32> to vector<8x128xf32>
    %132 = arith.addf %130, %131 : vector<8x128xf32>
    %133 = arith.negf %132 : vector<8x128xf32>
    %134 = math.exp %133 : vector<8x128xf32>
    %cst_42 = arith.constant 1.000000e+00 : f32
    %135 = vector.broadcast %cst_42 : f32 to vector<8x128xf32>
    %136 = arith.addf %135, %134 : vector<8x128xf32>
    %137 = arith.divf %135, %136 : vector<8x128xf32>
    %138 = vector.extract_strided_slice %119 {offsets = [0, 256], sizes = [8, 128], strides = [1, 1]} : vector<8x384xf32> to vector<8x128xf32>
    %139 = vector.extract_strided_slice %121 {offsets = [0, 256], sizes = [8, 128], strides = [1, 1]} : vector<8x384xf32> to vector<8x128xf32>
    %140 = arith.addf %139, %9 : vector<8x128xf32>
    %141 = arith.mulf %129, %140 : vector<8x128xf32>
    %142 = arith.addf %138, %141 : vector<8x128xf32>
    %143 = math.tanh %142 : vector<8x128xf32>
    %cst_43 = arith.constant 1.000000e+00 : f32
    %144 = vector.broadcast %cst_43 : f32 to vector<8x128xf32>
    %145 = arith.subf %144, %137 : vector<8x128xf32>
    %146 = arith.mulf %145, %143 : vector<8x128xf32>
    %147 = arith.mulf %137, %113 : vector<8x128xf32>
    %148 = arith.addf %146, %147 : vector<8x128xf32>
    %149 = arith.index_cast %117 : i32 to index
    %c0_44 = arith.constant 0 : index
    %150 = vector.load %arg5[%149, %c0_44] : memref<64x128xf32, #tpu.memory_space<vmem>>, vector<8x128xf32>
    tpu.vector_store %arg5[%149, %c0_44], %148 {strides = array<i32>} : memref<64x128xf32, #tpu.memory_space<vmem>>, vector<8x128xf32>,
    %c4_i32 = arith.constant 4 : i32
    %c8_i32_45 = arith.constant 8 : i32
    %151 = arith.muli %c4_i32, %c8_i32_45 : i32
    %152 = tpu.assume_multiple %151, 8 : i32
    %153 = arith.index_cast %152 : i32 to index
    %c0_46 = arith.constant 0 : index
    %154 = vector.load %arg6[%153, %c0_46] : memref<64x384xf32, #tpu.memory_space<vmem>>, vector<8x384xf32>
    %c0_47 = arith.constant 0 : index
    %c0_48 = arith.constant 0 : index
    %155 = vector.load %arg2[%c0_47, %c0_48] : memref<128x384xf32, #tpu.memory_space<vmem>>, vector<128x384xf32>
    %cst_49 = arith.constant dense<0.000000e+00> : vector<8x384xf32>
    %156 = tpu.matmul %148, %155, %cst_49 {dimension_numbers = #tpu.dot_dimension_numbers<[1], [0], [0], [1], [0, 0, 1, 1], [], []>} : vector<8x128xf32>, vector<128x384xf32>, vector<8x384xf32> -> vector<8x384xf32>
    %157 = vector.extract_strided_slice %154 {offsets = [0, 0], sizes = [8, 128], strides = [1, 1]} : vector<8x384xf32> to vector<8x128xf32>
    %158 = vector.extract_strided_slice %156 {offsets = [0, 0], sizes = [8, 128], strides = [1, 1]} : vector<8x384xf32> to vector<8x128xf32>
    %159 = arith.addf %157, %158 : vector<8x128xf32>
    %160 = arith.negf %159 : vector<8x128xf32>
    %161 = math.exp %160 : vector<8x128xf32>
    %cst_50 = arith.constant 1.000000e+00 : f32
    %162 = vector.broadcast %cst_50 : f32 to vector<8x128xf32>
    %163 = arith.addf %162, %161 : vector<8x128xf32>
    %164 = arith.divf %162, %163 : vector<8x128xf32>
    %165 = vector.extract_strided_slice %154 {offsets = [0, 128], sizes = [8, 128], strides = [1, 1]} : vector<8x384xf32> to vector<8x128xf32>
    %166 = vector.extract_strided_slice %156 {offsets = [0, 128], sizes = [8, 128], strides = [1, 1]} : vector<8x384xf32> to vector<8x128xf32>
    %167 = arith.addf %165, %166 : vector<8x128xf32>
    %168 = arith.negf %167 : vector<8x128xf32>
    %169 = math.exp %168 : vector<8x128xf32>
    %cst_51 = arith.constant 1.000000e+00 : f32
    %170 = vector.broadcast %cst_51 : f32 to vector<8x128xf32>
    %171 = arith.addf %170, %169 : vector<8x128xf32>
    %172 = arith.divf %170, %171 : vector<8x128xf32>
    %173 = vector.extract_strided_slice %154 {offsets = [0, 256], sizes = [8, 128], strides = [1, 1]} : vector<8x384xf32> to vector<8x128xf32>
    %174 = vector.extract_strided_slice %156 {offsets = [0, 256], sizes = [8, 128], strides = [1, 1]} : vector<8x384xf32> to vector<8x128xf32>
    %175 = arith.addf %174, %9 : vector<8x128xf32>
    %176 = arith.mulf %164, %175 : vector<8x128xf32>
    %177 = arith.addf %173, %176 : vector<8x128xf32>
    %178 = math.tanh %177 : vector<8x128xf32>
    %cst_52 = arith.constant 1.000000e+00 : f32
    %179 = vector.broadcast %cst_52 : f32 to vector<8x128xf32>
    %180 = arith.subf %179, %172 : vector<8x128xf32>
    %181 = arith.mulf %180, %178 : vector<8x128xf32>
    %182 = arith.mulf %172, %148 : vector<8x128xf32>
    %183 = arith.addf %181, %182 : vector<8x128xf32>
    %184 = arith.index_cast %152 : i32 to index
    %c0_53 = arith.constant 0 : index
    %185 = vector.load %arg5[%184, %c0_53] : memref<64x128xf32, #tpu.memory_space<vmem>>, vector<8x128xf32>
    tpu.vector_store %arg5[%184, %c0_53], %183 {strides = array<i32>} : memref<64x128xf32, #tpu.memory_space<vmem>>, vector<8x128xf32>,
    %c5_i32 = arith.constant 5 : i32
    %c8_i32_54 = arith.constant 8 : i32
    %186 = arith.muli %c5_i32, %c8_i32_54 : i32
    %187 = tpu.assume_multiple %186, 8 : i32
    %188 = arith.index_cast %187 : i32 to index
    %c0_55 = arith.constant 0 : index
    %189 = vector.load %arg6[%188, %c0_55] : memref<64x384xf32, #tpu.memory_space<vmem>>, vector<8x384xf32>
    %c0_56 = arith.constant 0 : index
    %c0_57 = arith.constant 0 : index
    %190 = vector.load %arg2[%c0_56, %c0_57] : memref<128x384xf32, #tpu.memory_space<vmem>>, vector<128x384xf32>
    %cst_58 = arith.constant dense<0.000000e+00> : vector<8x384xf32>
    %191 = tpu.matmul %183, %190, %cst_58 {dimension_numbers = #tpu.dot_dimension_numbers<[1], [0], [0], [1], [0, 0, 1, 1], [], []>} : vector<8x128xf32>, vector<128x384xf32>, vector<8x384xf32> -> vector<8x384xf32>
    %192 = vector.extract_strided_slice %189 {offsets = [0, 0], sizes = [8, 128], strides = [1, 1]} : vector<8x384xf32> to vector<8x128xf32>
    %193 = vector.extract_strided_slice %191 {offsets = [0, 0], sizes = [8, 128], strides = [1, 1]} : vector<8x384xf32> to vector<8x128xf32>
    %194 = arith.addf %192, %193 : vector<8x128xf32>
    %195 = arith.negf %194 : vector<8x128xf32>
    %196 = math.exp %195 : vector<8x128xf32>
    %cst_59 = arith.constant 1.000000e+00 : f32
    %197 = vector.broadcast %cst_59 : f32 to vector<8x128xf32>
    %198 = arith.addf %197, %196 : vector<8x128xf32>
    %199 = arith.divf %197, %198 : vector<8x128xf32>
    %200 = vector.extract_strided_slice %189 {offsets = [0, 128], sizes = [8, 128], strides = [1, 1]} : vector<8x384xf32> to vector<8x128xf32>
    %201 = vector.extract_strided_slice %191 {offsets = [0, 128], sizes = [8, 128], strides = [1, 1]} : vector<8x384xf32> to vector<8x128xf32>
    %202 = arith.addf %200, %201 : vector<8x128xf32>
    %203 = arith.negf %202 : vector<8x128xf32>
    %204 = math.exp %203 : vector<8x128xf32>
    %cst_60 = arith.constant 1.000000e+00 : f32
    %205 = vector.broadcast %cst_60 : f32 to vector<8x128xf32>
    %206 = arith.addf %205, %204 : vector<8x128xf32>
    %207 = arith.divf %205, %206 : vector<8x128xf32>
    %208 = vector.extract_strided_slice %189 {offsets = [0, 256], sizes = [8, 128], strides = [1, 1]} : vector<8x384xf32> to vector<8x128xf32>
    %209 = vector.extract_strided_slice %191 {offsets = [0, 256], sizes = [8, 128], strides = [1, 1]} : vector<8x384xf32> to vector<8x128xf32>
    %210 = arith.addf %209, %9 : vector<8x128xf32>
    %211 = arith.mulf %199, %210 : vector<8x128xf32>
    %212 = arith.addf %208, %211 : vector<8x128xf32>
    %213 = math.tanh %212 : vector<8x128xf32>
    %cst_61 = arith.constant 1.000000e+00 : f32
    %214 = vector.broadcast %cst_61 : f32 to vector<8x128xf32>
    %215 = arith.subf %214, %207 : vector<8x128xf32>
    %216 = arith.mulf %215, %213 : vector<8x128xf32>
    %217 = arith.mulf %207, %183 : vector<8x128xf32>
    %218 = arith.addf %216, %217 : vector<8x128xf32>
    %219 = arith.index_cast %187 : i32 to index
    %c0_62 = arith.constant 0 : index
    %220 = vector.load %arg5[%219, %c0_62] : memref<64x128xf32, #tpu.memory_space<vmem>>, vector<8x128xf32>
    tpu.vector_store %arg5[%219, %c0_62], %218 {strides = array<i32>} : memref<64x128xf32, #tpu.memory_space<vmem>>, vector<8x128xf32>,
    %c6_i32 = arith.constant 6 : i32
    %c8_i32_63 = arith.constant 8 : i32
    %221 = arith.muli %c6_i32, %c8_i32_63 : i32
    %222 = tpu.assume_multiple %221, 8 : i32
    %223 = arith.index_cast %222 : i32 to index
    %c0_64 = arith.constant 0 : index
    %224 = vector.load %arg6[%223, %c0_64] : memref<64x384xf32, #tpu.memory_space<vmem>>, vector<8x384xf32>
    %c0_65 = arith.constant 0 : index
    %c0_66 = arith.constant 0 : index
    %225 = vector.load %arg2[%c0_65, %c0_66] : memref<128x384xf32, #tpu.memory_space<vmem>>, vector<128x384xf32>
    %cst_67 = arith.constant dense<0.000000e+00> : vector<8x384xf32>
    %226 = tpu.matmul %218, %225, %cst_67 {dimension_numbers = #tpu.dot_dimension_numbers<[1], [0], [0], [1], [0, 0, 1, 1], [], []>} : vector<8x128xf32>, vector<128x384xf32>, vector<8x384xf32> -> vector<8x384xf32>
    %227 = vector.extract_strided_slice %224 {offsets = [0, 0], sizes = [8, 128], strides = [1, 1]} : vector<8x384xf32> to vector<8x128xf32>
    %228 = vector.extract_strided_slice %226 {offsets = [0, 0], sizes = [8, 128], strides = [1, 1]} : vector<8x384xf32> to vector<8x128xf32>
    %229 = arith.addf %227, %228 : vector<8x128xf32>
    %230 = arith.negf %229 : vector<8x128xf32>
    %231 = math.exp %230 : vector<8x128xf32>
    %cst_68 = arith.constant 1.000000e+00 : f32
    %232 = vector.broadcast %cst_68 : f32 to vector<8x128xf32>
    %233 = arith.addf %232, %231 : vector<8x128xf32>
    %234 = arith.divf %232, %233 : vector<8x128xf32>
    %235 = vector.extract_strided_slice %224 {offsets = [0, 128], sizes = [8, 128], strides = [1, 1]} : vector<8x384xf32> to vector<8x128xf32>
    %236 = vector.extract_strided_slice %226 {offsets = [0, 128], sizes = [8, 128], strides = [1, 1]} : vector<8x384xf32> to vector<8x128xf32>
    %237 = arith.addf %235, %236 : vector<8x128xf32>
    %238 = arith.negf %237 : vector<8x128xf32>
    %239 = math.exp %238 : vector<8x128xf32>
    %cst_69 = arith.constant 1.000000e+00 : f32
    %240 = vector.broadcast %cst_69 : f32 to vector<8x128xf32>
    %241 = arith.addf %240, %239 : vector<8x128xf32>
    %242 = arith.divf %240, %241 : vector<8x128xf32>
    %243 = vector.extract_strided_slice %224 {offsets = [0, 256], sizes = [8, 128], strides = [1, 1]} : vector<8x384xf32> to vector<8x128xf32>
    %244 = vector.extract_strided_slice %226 {offsets = [0, 256], sizes = [8, 128], strides = [1, 1]} : vector<8x384xf32> to vector<8x128xf32>
    %245 = arith.addf %244, %9 : vector<8x128xf32>
    %246 = arith.mulf %234, %245 : vector<8x128xf32>
    %247 = arith.addf %243, %246 : vector<8x128xf32>
    %248 = math.tanh %247 : vector<8x128xf32>
    %cst_70 = arith.constant 1.000000e+00 : f32
    %249 = vector.broadcast %cst_70 : f32 to vector<8x128xf32>
    %250 = arith.subf %249, %242 : vector<8x128xf32>
    %251 = arith.mulf %250, %248 : vector<8x128xf32>
    %252 = arith.mulf %242, %218 : vector<8x128xf32>
    %253 = arith.addf %251, %252 : vector<8x128xf32>
    %254 = arith.index_cast %222 : i32 to index
    %c0_71 = arith.constant 0 : index
    %255 = vector.load %arg5[%254, %c0_71] : memref<64x128xf32, #tpu.memory_space<vmem>>, vector<8x128xf32>
    tpu.vector_store %arg5[%254, %c0_71], %253 {strides = array<i32>} : memref<64x128xf32, #tpu.memory_space<vmem>>, vector<8x128xf32>,
    %c7_i32 = arith.constant 7 : i32
    %c8_i32_72 = arith.constant 8 : i32
    %256 = arith.muli %c7_i32, %c8_i32_72 : i32
    %257 = tpu.assume_multiple %256, 8 : i32
    %258 = arith.index_cast %257 : i32 to index
    %c0_73 = arith.constant 0 : index
    %259 = vector.load %arg6[%258, %c0_73] : memref<64x384xf32, #tpu.memory_space<vmem>>, vector<8x384xf32>
    %c0_74 = arith.constant 0 : index
    %c0_75 = arith.constant 0 : index
    %260 = vector.load %arg2[%c0_74, %c0_75] : memref<128x384xf32, #tpu.memory_space<vmem>>, vector<128x384xf32>
    %cst_76 = arith.constant dense<0.000000e+00> : vector<8x384xf32>
    %261 = tpu.matmul %253, %260, %cst_76 {dimension_numbers = #tpu.dot_dimension_numbers<[1], [0], [0], [1], [0, 0, 1, 1], [], []>} : vector<8x128xf32>, vector<128x384xf32>, vector<8x384xf32> -> vector<8x384xf32>
    %262 = vector.extract_strided_slice %259 {offsets = [0, 0], sizes = [8, 128], strides = [1, 1]} : vector<8x384xf32> to vector<8x128xf32>
    %263 = vector.extract_strided_slice %261 {offsets = [0, 0], sizes = [8, 128], strides = [1, 1]} : vector<8x384xf32> to vector<8x128xf32>
    %264 = arith.addf %262, %263 : vector<8x128xf32>
    %265 = arith.negf %264 : vector<8x128xf32>
    %266 = math.exp %265 : vector<8x128xf32>
    %cst_77 = arith.constant 1.000000e+00 : f32
    %267 = vector.broadcast %cst_77 : f32 to vector<8x128xf32>
    %268 = arith.addf %267, %266 : vector<8x128xf32>
    %269 = arith.divf %267, %268 : vector<8x128xf32>
    %270 = vector.extract_strided_slice %259 {offsets = [0, 128], sizes = [8, 128], strides = [1, 1]} : vector<8x384xf32> to vector<8x128xf32>
    %271 = vector.extract_strided_slice %261 {offsets = [0, 128], sizes = [8, 128], strides = [1, 1]} : vector<8x384xf32> to vector<8x128xf32>
    %272 = arith.addf %270, %271 : vector<8x128xf32>
    %273 = arith.negf %272 : vector<8x128xf32>
    %274 = math.exp %273 : vector<8x128xf32>
    %cst_78 = arith.constant 1.000000e+00 : f32
    %275 = vector.broadcast %cst_78 : f32 to vector<8x128xf32>
    %276 = arith.addf %275, %274 : vector<8x128xf32>
    %277 = arith.divf %275, %276 : vector<8x128xf32>
    %278 = vector.extract_strided_slice %259 {offsets = [0, 256], sizes = [8, 128], strides = [1, 1]} : vector<8x384xf32> to vector<8x128xf32>
    %279 = vector.extract_strided_slice %261 {offsets = [0, 256], sizes = [8, 128], strides = [1, 1]} : vector<8x384xf32> to vector<8x128xf32>
    %280 = arith.addf %279, %9 : vector<8x128xf32>
    %281 = arith.mulf %269, %280 : vector<8x128xf32>
    %282 = arith.addf %278, %281 : vector<8x128xf32>
    %283 = math.tanh %282 : vector<8x128xf32>
    %cst_79 = arith.constant 1.000000e+00 : f32
    %284 = vector.broadcast %cst_79 : f32 to vector<8x128xf32>
    %285 = arith.subf %284, %277 : vector<8x128xf32>
    %286 = arith.mulf %285, %283 : vector<8x128xf32>
    %287 = arith.mulf %277, %253 : vector<8x128xf32>
    %288 = arith.addf %286, %287 : vector<8x128xf32>
    %289 = arith.index_cast %257 : i32 to index
    %c0_80 = arith.constant 0 : index
    %290 = vector.load %arg5[%289, %c0_80] : memref<64x128xf32, #tpu.memory_space<vmem>>, vector<8x128xf32>
    tpu.vector_store %arg5[%289, %c0_80], %288 {strides = array<i32>} : memref<64x128xf32, #tpu.memory_space<vmem>>, vector<8x128xf32>,
    %c8_i32_81 = arith.constant 8 : i32
    return
  }
}

</mosaic_0001>

<llo_original>
// kernel: tpu_custom_call.1
$region0: #{tpu_custom_call.1}
  #allocation0 [shape = 'u32[]', space=smem, size = 0x4, offset = 0x4, fixed_abs, tag = 'smem constant byte address 0x4 - core index']
  #allocation1 [shape = 'u32[72,128]{1,0:T(1,128)}', space=vmem, size = 0x9000, scoped, tag = 'internal scratch']
  #allocation2 [shape = 'f32[64,384]{1,0:T(8,128)}', space=vmem, size = 0x18000, scoped, tag = 'scratch operand']
  %s0 = inlined_call_operand.vmem [shape: f32[64,7], index: 0, kind: input, shape index: {}]
  %s1 = inlined_call_operand.vmem [shape: f32[7,384], index: 1, kind: input, shape index: {}]
  %s2 = inlined_call_operand.hbm [shape: f32[128,384], index: 2, kind: input, shape index: {}]
  %s3 = inlined_call_operand.vmem [shape: f32[1,384], index: 3, kind: input, shape index: {}]
  %s4 = inlined_call_operand.vmem [shape: f32[1,128], index: 4, kind: input, shape index: {}]
  %s5 = inlined_call_operand.hbm [shape: f32[64,128], index: 5, kind: output, shape index: {}]
  %s6 = sld [smem:[#allocation0]]
  $region34: #{tpu_custom_call.1} parent=0
    _
  %s8 = ssub.s32 1, %s6
  %s9 = scalar_select 0, %s8, %s6
  $region1: #{tpu_custom_call.1} parent=0
    #allocation3 [shape = 'u8[196608]{0}', space=vmem, size = 0x30000, scoped, tag = 'input window, operand 2, single buffered']
    #allocation4 [shape = 's32[1]{0}', space=sflag, size = 0x4, scoped, tag = 'scoped memory for tpu_custom_call.1']
    #allocation5 [shape = 's32[1]{0}', space=sflag, size = 0x4, scoped, tag = 'scoped memory for tpu_custom_call.1']
    #allocation6 [shape = 'u8[32768]{0}', space=vmem, size = 0x8000, scoped, tag = 'output window, operand 0, single buffered']
    %10 = vsyncpa [#allocation4], 0
    %11 = vsyncpa [#allocation5], 0
    // Predicated region
    $region2: #{tpu_custom_call.1} parent=1 // pred_check
      _
    $region3: #{tpu_custom_call.1} parent=1 // pred_check_branch
      %13 = sbr.rel (0) target = $region5
    $region4: #{tpu_custom_call.1} parent=1 // pred_region
      _
    $region5: #{tpu_custom_call.1} parent=1 // pred_fallthru
      _
    // Predicated region
    $region6: #{tpu_custom_call.1} parent=1 // pred_check
      _
    $region7: #{tpu_custom_call.1} parent=1 // pred_check_branch
      %15 = sbr.rel (0) target = $region9
    $region8: #{tpu_custom_call.1} parent=1 // pred_region
      _
    $region9: #{tpu_custom_call.1} parent=1 // pred_fallthru
      _
    // Predicated region
    $region10: #{tpu_custom_call.1} parent=1 // pred_check
      _
    $region11: #{tpu_custom_call.1} parent=1 // pred_check_branch
      %17 = sbr.rel (0) target = $region13
    $region12: #{tpu_custom_call.1} parent=1 // pred_region
      %19 = vsyncadd [#allocation4], 0
      %s20 = sshll.u32 %s2, 4
      %s21 = int_to_ptr.hbm [resolvable:$true] %s20
      %s22 = sshll.u32 [#allocation3], 4
      %s23 = int_to_ptr.vmem [resolvable:$true] %s22
      %28 = dma.hbm_to_vmem [thread:$0]  %s21, 6144, %s23, [#allocation4], 384, 384, 24
    $region13: #{tpu_custom_call.1} parent=1 // pred_fallthru
      _
    // Predicated region
    $region14: #{tpu_custom_call.1} parent=1 // pred_check
      _
    $region15: #{tpu_custom_call.1} parent=1 // pred_check_branch
      %30 = sbr.rel (0) target = $region17
    $region16: #{tpu_custom_call.1} parent=1 // pred_region
      _
    $region17: #{tpu_custom_call.1} parent=1 // pred_fallthru
      _
    // Predicated region
    $region18: #{tpu_custom_call.1} parent=1 // pred_check
      _
    $region19: #{tpu_custom_call.1} parent=1 // pred_check_branch
      %32 = sbr.rel (0) target = $region21
    $region20: #{tpu_custom_call.1} parent=1 // pred_region
      _
    $region21: #{tpu_custom_call.1} parent=1 // pred_fallthru
      _
    // Predicated region
    $region22: #{tpu_custom_call.1} parent=1 // pred_check
      _
    $region23: #{tpu_custom_call.1} parent=1 // pred_check_branch
      %34 = sbr.rel (0) target = $region25
    $region24: #{tpu_custom_call.1} parent=1 // pred_region
      %36 = dma.done [#allocation4], 6144
    $region25: #{tpu_custom_call.1} parent=1 // pred_fallthru
      _
    %v37 = vld [vmem:[%s0] sm:$0xff]
    %v38 = vld [vmem:[%s0 + $0x8] sm:$0xff]
    %v39 = vld [vmem:[%s0 + $0x10] sm:$0xff]
    %v40 = vld [vmem:[%s0 + $0x18] sm:$0xff]
    %v41 = vld [vmem:[%s0 + $0x20] sm:$0xff]
    %v42 = vld [vmem:[%s0 + $0x28] sm:$0xff]
    %v43 = vld [vmem:[%s0 + $0x30] sm:$0xff]
    %v44 = vld [vmem:[%s0 + $0x38] sm:$0xff]
    %v45 = vld [vmem:[%s1] sm:$0x7f]
    %v46 = vld [vmem:[%s1 + $0x8] sm:$0x7f]
    %v47 = vld [vmem:[%s1 + $0x10] sm:$0x7f]
    %v48 = vld [vmem:[%s3] sm:$0x7]
    %v50 = vperm.slane %v48, 0
    %v51 = vperm.slane %v48, 1
    %v52 = vperm.slane %v48, 2
    %vm56 = vcmask 56320
    %v58 = vsel %vm56, %v37, 0
    %v61 = vsel %vm56, %v38, 0
    %v64 = vsel %vm56, %v39, 0
    %v67 = vsel %vm56, %v40, 0
    %v70 = vsel %vm56, %v41, 0
    %v73 = vsel %vm56, %v42, 0
    %v76 = vsel %vm56, %v43, 0
    %v79 = vsel %vm56, %v44, 0
    %vm81 = vcmask 1046528
    %v83 = vsel %vm81, %v45, 0
    %v86 = vsel %vm81, %v46, 0
    %v89 = vsel %vm81, %v47, 0
    %91 = vmatpush.msra.mxu0 0.0
    %92 = vmatpush.msra.mxu0 0.0
    %93 = vmatpush.msra.mxu0 0.0
    %94 = vmatpush.msra.mxu0 0.0
    %95 = vmatpush.msra.mxu0 0.0
    %96 = vmatpush.msra.mxu0 0.0
    %97 = vmatpush.msra.mxu0 0.0
    %98 = vmatpush.msra.mxu0 0.0
    %99 = vmatpush.msra.mxu0 0.0
    %100 = vmatpush.msra.mxu0 0.0
    %101 = vmatpush.msra.mxu0 0.0
    %102 = vmatpush.msra.mxu0 0.0
    %103 = vmatpush.msra.mxu0 0.0
    %104 = vmatpush.msra.mxu0 0.0
    %105 = vmatpush.msra.mxu0 0.0
    %106 = vmatpush.msra.mxu0 %v83
    %107 = vmatmul.f32.gmra.mxu0 %v58
    %v108 = vpop.f32.mrf.mxu0
    %v109 = vadd.f32 %v50, %v108
    %110 = vmatmul.f32.gmra.mxu0 %v61
    %v111 = vpop.f32.mrf.mxu0
    %v112 = vadd.f32 %v50, %v111
    %113 = vmatmul.f32.gmra.mxu0 %v64
    %v114 = vpop.f32.mrf.mxu0
    %v115 = vadd.f32 %v50, %v114
    %116 = vmatmul.f32.gmra.mxu0 %v67
    %v117 = vpop.f32.mrf.mxu0
    %v118 = vadd.f32 %v50, %v117
    %119 = vmatmul.f32.gmra.mxu0 %v70
    %v120 = vpop.f32.mrf.mxu0
    %v121 = vadd.f32 %v50, %v120
    %122 = vmatmul.f32.gmra.mxu0 %v73
    %v123 = vpop.f32.mrf.mxu0
    %v124 = vadd.f32 %v50, %v123
    %125 = vmatmul.f32.gmra.mxu0 %v76
    %v126 = vpop.f32.mrf.mxu0
    %v127 = vadd.f32 %v50, %v126
    %128 = vmatmul.f32.gmra.mxu0 %v79
    %v129 = vpop.f32.mrf.mxu0
    %v130 = vadd.f32 %v50, %v129
    %131 = vdwg.mxu0
    %132 = vmatpush.msra.mxu0 0.0
    %133 = vmatpush.msra.mxu0 0.0
    %134 = vmatpush.msra.mxu0 0.0
    %135 = vmatpush.msra.mxu0 0.0
    %136 = vmatpush.msra.mxu0 0.0
    %137 = vmatpush.msra.mxu0 0.0
    %138 = vmatpush.msra.mxu0 0.0
    %139 = vmatpush.msra.mxu0 0.0
    %140 = vmatpush.msra.mxu0 0.0
    %141 = vmatpush.msra.mxu0 0.0
    %142 = vmatpush.msra.mxu0 0.0
    %143 = vmatpush.msra.mxu0 0.0
    %144 = vmatpush.msra.mxu0 0.0
    %145 = vmatpush.msra.mxu0 0.0
    %146 = vmatpush.msra.mxu0 0.0
    %147 = vmatpush.msra.mxu0 %v86
    %148 = vmatmul.f32.gmra.mxu0 %v58
    %v149 = vpop.f32.mrf.mxu0
    %v150 = vadd.f32 %v51, %v149
    %151 = vmatmul.f32.gmra.mxu0 %v61
    %v152 = vpop.f32.mrf.mxu0
    %v153 = vadd.f32 %v51, %v152
    %154 = vmatmul.f32.gmra.mxu0 %v64
    %v155 = vpop.f32.mrf.mxu0
    %v156 = vadd.f32 %v51, %v155
    %157 = vmatmul.f32.gmra.mxu0 %v67
    %v158 = vpop.f32.mrf.mxu0
    %v159 = vadd.f32 %v51, %v158
    %160 = vmatmul.f32.gmra.mxu0 %v70
    %v161 = vpop.f32.mrf.mxu0
    %v162 = vadd.f32 %v51, %v161
    %163 = vmatmul.f32.gmra.mxu0 %v73
    %v164 = vpop.f32.mrf.mxu0
    %v165 = vadd.f32 %v51, %v164
    %166 = vmatmul.f32.gmra.mxu0 %v76
    %v167 = vpop.f32.mrf.mxu0
    %v168 = vadd.f32 %v51, %v167
    %169 = vmatmul.f32.gmra.mxu0 %v79
    %v170 = vpop.f32.mrf.mxu0
    %v171 = vadd.f32 %v51, %v170
    %172 = vdwg.mxu0
    %173 = vmatpush.msra.mxu0 0.0
    %174 = vmatpush.msra.mxu0 0.0
    %175 = vmatpush.msra.mxu0 0.0
    %176 = vmatpush.msra.mxu0 0.0
    %177 = vmatpush.msra.mxu0 0.0
    %178 = vmatpush.msra.mxu0 0.0
    %179 = vmatpush.msra.mxu0 0.0
    %180 = vmatpush.msra.mxu0 0.0
    %181 = vmatpush.msra.mxu0 0.0
    %182 = vmatpush.msra.mxu0 0.0
    %183 = vmatpush.msra.mxu0 0.0
    %184 = vmatpush.msra.mxu0 0.0
    %185 = vmatpush.msra.mxu0 0.0
    %186 = vmatpush.msra.mxu0 0.0
    %187 = vmatpush.msra.mxu0 0.0
    %188 = vmatpush.msra.mxu0 %v89
    %189 = vmatmul.f32.gmra.mxu0 %v58
    %v190 = vpop.f32.mrf.mxu0
    %v191 = vadd.f32 %v52, %v190
    %192 = vmatmul.f32.gmra.mxu0 %v61
    %v193 = vpop.f32.mrf.mxu0
    %v194 = vadd.f32 %v52, %v193
    %195 = vmatmul.f32.gmra.mxu0 %v64
    %v196 = vpop.f32.mrf.mxu0
    %v197 = vadd.f32 %v52, %v196
    %198 = vmatmul.f32.gmra.mxu0 %v67
    %v199 = vpop.f32.mrf.mxu0
    %v200 = vadd.f32 %v52, %v199
    %201 = vmatmul.f32.gmra.mxu0 %v70
    %v202 = vpop.f32.mrf.mxu0
    %v203 = vadd.f32 %v52, %v202
    %204 = vmatmul.f32.gmra.mxu0 %v73
    %v205 = vpop.f32.mrf.mxu0
    %v206 = vadd.f32 %v52, %v205
    %207 = vmatmul.f32.gmra.mxu0 %v76
    %v208 = vpop.f32.mrf.mxu0
    %v209 = vadd.f32 %v52, %v208
    %210 = vmatmul.f32.gmra.mxu0 %v79
    %v211 = vpop.f32.mrf.mxu0
    %v212 = vadd.f32 %v52, %v211
    %213 = vdwg.mxu0
    %214 = vst [vmem:[#allocation2] sm:$0xff] %v109
    %215 = vst [vmem:[#allocation2 + $0x8] sm:$0xff] %v150
    %216 = vst [vmem:[#allocation2 + $0x10] sm:$0xff] %v191
    %217 = vst [vmem:[#allocation2 + $0x18] sm:$0xff] %v112
    %218 = vst [vmem:[#allocation2 + $0x20] sm:$0xff] %v153
    %219 = vst [vmem:[#allocation2 + $0x28] sm:$0xff] %v194
    %220 = vst [vmem:[#allocation2 + $0x30] sm:$0xff] %v115
    %221 = vst [vmem:[#allocation2 + $0x38] sm:$0xff] %v156
    %222 = vst [vmem:[#allocation2 + $0x40] sm:$0xff] %v197
    %223 = vst [vmem:[#allocation2 + $0x48] sm:$0xff] %v118
    %224 = vst [vmem:[#allocation2 + $0x50] sm:$0xff] %v159
    %225 = vst [vmem:[#allocation2 + $0x58] sm:$0xff] %v200
    %226 = vst [vmem:[#allocation2 + $0x60] sm:$0xff] %v121
    %227 = vst [vmem:[#allocation2 + $0x68] sm:$0xff] %v162
    %228 = vst [vmem:[#allocation2 + $0x70] sm:$0xff] %v203
    %229 = vst [vmem:[#allocation2 + $0x78] sm:$0xff] %v124
    %230 = vst [vmem:[#allocation2 + $0x80] sm:$0xff] %v165
    %231 = vst [vmem:[#allocation2 + $0x88] sm:$0xff] %v206
    %232 = vst [vmem:[#allocation2 + $0x90] sm:$0xff] %v127
    %233 = vst [vmem:[#allocation2 + $0x98] sm:$0xff] %v168
    %234 = vst [vmem:[#allocation2 + $0xa0] sm:$0xff] %v209
    %235 = vst [vmem:[#allocation2 + $0xa8] sm:$0xff] %v130
    %236 = vst [vmem:[#allocation2 + $0xb0] sm:$0xff] %v171
    %237 = vst [vmem:[#allocation2 + $0xb8] sm:$0xff] %v212
    %v238 = vld [vmem:[%s4] sm:$0x1]
    %v240 = vperm.slane %v238, 0
    %s242 = smul.u32 0, 3
    %s243 = smul.addr %s242, 8
    %s244 = scalar_lea.vmem [#allocation2], %s243
    %v245 = vld [vmem:[%s244] sm:$0xff]
    %v246 = vld [vmem:[%s244 + $0x8] sm:$0xff]
    %v247 = vld [vmem:[%s244 + $0x10] sm:$0xff]
    %v248 = vld [vmem:[#allocation3] sm:$0xff]
    %v249 = vld [vmem:[#allocation3 + $0x8] sm:$0xff]
    %v250 = vld [vmem:[#allocation3 + $0x10] sm:$0xff]
    %v251 = vld [vmem:[#allocation3 + $0x18] sm:$0xff]
    %v252 = vld [vmem:[#allocation3 + $0x20] sm:$0xff]
    %v253 = vld [vmem:[#allocation3 + $0x28] sm:$0xff]
    %v254 = vld [vmem:[#allocation3 + $0x30] sm:$0xff]
    %v255 = vld [vmem:[#allocation3 + $0x38] sm:$0xff]
    %v256 = vld [vmem:[#allocation3 + $0x40] sm:$0xff]
    %v257 = vld [vmem:[#allocation3 + $0x48] sm:$0xff]
    %v258 = vld [vmem:[#allocation3 + $0x50] sm:$0xff]
    %v259 = vld [vmem:[#allocation3 + $0x58] sm:$0xff]
    %v260 = vld [vmem:[#allocation3 + $0x60] sm:$0xff]
    %v261 = vld [vmem:[#allocation3 + $0x68] sm:$0xff]
    %v262 = vld [vmem:[#allocation3 + $0x70] sm:$0xff]
    %v263 = vld [vmem:[#allocation3 + $0x78] sm:$0xff]
    %v264 = vld [vmem:[#allocation3 + $0x80] sm:$0xff]
    %v265 = vld [vmem:[#allocation3 + $0x88] sm:$0xff]
    %v266 = vld [vmem:[#allocation3 + $0x90] sm:$0xff]
    %v267 = vld [vmem:[#allocation3 + $0x98] sm:$0xff]
    %v268 = vld [vmem:[#allocation3 + $0xa0] sm:$0xff]
    %v269 = vld [vmem:[#allocation3 + $0xa8] sm:$0xff]
    %v270 = vld [vmem:[#allocation3 + $0xb0] sm:$0xff]
    %v271 = vld [vmem:[#allocation3 + $0xb8] sm:$0xff]
    %v272 = vld [vmem:[#allocation3 + $0xc0] sm:$0xff]
    %v273 = vld [vmem:[#allocation3 + $0xc8] sm:$0xff]
    %v274 = vld [vmem:[#allocation3 + $0xd0] sm:$0xff]
    %v275 = vld [vmem:[#allocation3 + $0xd8] sm:$0xff]
    %v276 = vld [vmem:[#allocation3 + $0xe0] sm:$0xff]
    %v277 = vld [vmem:[#allocation3 + $0xe8] sm:$0xff]
    %v278 = vld [vmem:[#allocation3 + $0xf0] sm:$0xff]
    %v279 = vld [vmem:[#allocation3 + $0xf8] sm:$0xff]
    %v280 = vld [vmem:[#allocation3 + $0x100] sm:$0xff]
    %v281 = vld [vmem:[#allocation3 + $0x108] sm:$0xff]
    %v282 = vld [vmem:[#allocation3 + $0x110] sm:$0xff]
    %v283 = vld [vmem:[#allocation3 + $0x118] sm:$0xff]
    %v284 = vld [vmem:[#allocation3 + $0x120] sm:$0xff]
    %v285 = vld [vmem:[#allocation3 + $0x128] sm:$0xff]
    %v286 = vld [vmem:[#allocation3 + $0x130] sm:$0xff]
    %v287 = vld [vmem:[#allocation3 + $0x138] sm:$0xff]
    %v288 = vld [vmem:[#allocation3 + $0x140] sm:$0xff]
    %v289 = vld [vmem:[#allocation3 + $0x148] sm:$0xff]
    %v290 = vld [vmem:[#allocation3 + $0x150] sm:$0xff]
    %v291 = vld [vmem:[#allocation3 + $0x158] sm:$0xff]
    %v292 = vld [vmem:[#allocation3 + $0x160] sm:$0xff]
    %v293 = vld [vmem:[#allocation3 + $0x168] sm:$0xff]
    %v294 = vld [vmem:[#allocation3 + $0x170] sm:$0xff]
    %v295 = vld [vmem:[#allocation3 + $0x178] sm:$0xff]
    %296 = vmatpush.msra.mxu0 %v293
    %297 = vmatpush.msra.mxu0 %v290
    %298 = vmatpush.msra.mxu0 %v287
    %299 = vmatpush.msra.mxu0 %v284
    %300 = vmatpush.msra.mxu0 %v281
    %301 = vmatpush.msra.mxu0 %v278
    %302 = vmatpush.msra.mxu0 %v275
    %303 = vmatpush.msra.mxu0 %v272
    %304 = vmatpush.msra.mxu0 %v269
    %305 = vmatpush.msra.mxu0 %v266
    %306 = vmatpush.msra.mxu0 %v263
    %307 = vmatpush.msra.mxu0 %v260
    %308 = vmatpush.msra.mxu0 %v257
    %309 = vmatpush.msra.mxu0 %v254
    %310 = vmatpush.msra.mxu0 %v251
    %311 = vmatpush.msra.mxu0 %v248
    %312 = vmatmul.f32.gmra.mxu0 0.0
    %v313 = vpop.f32.mrf.mxu0
    %v314 = vadd.f32 0.0, %v313
    %315 = vdwg.mxu0
    %316 = vmatpush.msra.mxu0 %v294
    %317 = vmatpush.msra.mxu0 %v291
    %318 = vmatpush.msra.mxu0 %v288
    %319 = vmatpush.msra.mxu0 %v285
    %320 = vmatpush.msra.mxu0 %v282
    %321 = vmatpush.msra.mxu0 %v279
    %322 = vmatpush.msra.mxu0 %v276
    %323 = vmatpush.msra.mxu0 %v273
    %324 = vmatpush.msra.mxu0 %v270
    %325 = vmatpush.msra.mxu0 %v267
    %326 = vmatpush.msra.mxu0 %v264
    %327 = vmatpush.msra.mxu0 %v261
    %328 = vmatpush.msra.mxu0 %v258
    %329 = vmatpush.msra.mxu0 %v255
    %330 = vmatpush.msra.mxu0 %v252
    %331 = vmatpush.msra.mxu0 %v249
    %332 = vmatmul.f32.gmra.mxu0 0.0
    %v333 = vpop.f32.mrf.mxu0
    %v334 = vadd.f32 0.0, %v333
    %335 = vdwg.mxu0
    %336 = vmatpush.msra.mxu0 %v295
    %337 = vmatpush.msra.mxu0 %v292
    %338 = vmatpush.msra.mxu0 %v289
    %339 = vmatpush.msra.mxu0 %v286
    %340 = vmatpush.msra.mxu0 %v283
    %341 = vmatpush.msra.mxu0 %v280
    %342 = vmatpush.msra.mxu0 %v277
    %343 = vmatpush.msra.mxu0 %v274
    %344 = vmatpush.msra.mxu0 %v271
    %345 = vmatpush.msra.mxu0 %v268
    %346 = vmatpush.msra.mxu0 %v265
    %347 = vmatpush.msra.mxu0 %v262
    %348 = vmatpush.msra.mxu0 %v259
    %349 = vmatpush.msra.mxu0 %v256
    %350 = vmatpush.msra.mxu0 %v253
    %351 = vmatpush.msra.mxu0 %v250
    %352 = vmatmul.f32.gmra.mxu0 0.0
    %v353 = vpop.f32.mrf.mxu0
    %v354 = vadd.f32 0.0, %v353
    %355 = vdwg.mxu0
    %v356 = vadd.f32 %v245, %v314
    %v357 = vxor.u32 %v356, 2147483648
    %v358 = vmul.f32 %v357, 1.442695
    %v359 = vpow.pop %v358
    %v360 = vadd.f32 %v359, 1.0
    %v361 = vrcp.pop %v360
    %v362 = vmul.f32 %v360, %v361
    %v363 = vsub.f32 1.0, %v362
    %v364 = vmul.f32 %v361, %v363
    %v365 = vadd.f32 %v361, %v364
    %vm366 = vweird.f32 %v360
    %vm367 = vweird.f32 %v361
    %vm368 = vmor %vm366, %vm367
    %v369 = vsel %vm368, %v361, %v365
    %v370 = vand.u32 2147483647, %v360
    %vm371 = vcmp.eq.f32.partialorder %v370, 8.507059e+37
    %v372 = vand.u32 %v360, 2147483648
    %v373 = vor.u32 1.1754944e-38, %v372
    %v374 = vsel %vm371, %v373, %v369
    %v375 = vmul.f32 1.0, %v374
    %v376 = vadd.f32 %v246, %v334
    %v377 = vxor.u32 %v376, 2147483648
    %v378 = vmul.f32 %v377, 1.442695
    %v379 = vpow.pop %v378
    %v380 = vadd.f32 %v379, 1.0
    %v381 = vrcp.pop %v380
    %v382 = vmul.f32 %v380, %v381
    %v383 = vsub.f32 1.0, %v382
    %v384 = vmul.f32 %v381, %v383
    %v385 = vadd.f32 %v381, %v384
    %vm386 = vweird.f32 %v380
    %vm387 = vweird.f32 %v381
    %vm388 = vmor %vm386, %vm387
    %v389 = vsel %vm388, %v381, %v385
    %v390 = vand.u32 2147483647, %v380
    %vm391 = vcmp.eq.f32.partialorder %v390, 8.507059e+37
    %v392 = vand.u32 %v380, 2147483648
    %v393 = vor.u32 1.1754944e-38, %v392
    %v394 = vsel %vm391, %v393, %v389
    %v395 = vmul.f32 1.0, %v394
    %v396 = vadd.f32 %v354, %v240
    %v397 = vmul.f32 %v375, %v396
    %v398 = vadd.f32 %v247, %v397
    %v399 = vtanh.pop %v398
    %v400 = vsub.f32 1.0, %v395
    %v401 = vmul.f32 %v400, %v399
    %v402 = vmul.f32 %v395, 0.0
    %v403 = vadd.f32 %v401, %v402
    %404 = vst [vmem:[#allocation6] sm:$0xff] %v403
    %s405 = smul.u32 1, 3
    %s406 = smul.addr %s405, 8
    %s407 = scalar_lea.vmem [#allocation2], %s406
    %v408 = vld [vmem:[%s407] sm:$0xff]
    %v409 = vld [vmem:[%s407 + $0x8] sm:$0xff]
    %v410 = vld [vmem:[%s407 + $0x10] sm:$0xff]
    %v411 = vld [vmem:[#allocation3] sm:$0xff]
    %v412 = vld [vmem:[#allocation3 + $0x8] sm:$0xff]
    %v413 = vld [vmem:[#allocation3 + $0x10] sm:$0xff]
    %v414 = vld [vmem:[#allocation3 + $0x18] sm:$0xff]
    %v415 = vld [vmem:[#allocation3 + $0x20] sm:$0xff]
    %v416 = vld [vmem:[#allocation3 + $0x28] sm:$0xff]
    %v417 = vld [vmem:[#allocation3 + $0x30] sm:$0xff]
    %v418 = vld [vmem:[#allocation3 + $0x38] sm:$0xff]
    %v419 = vld [vmem:[#allocation3 + $0x40] sm:$0xff]
    %v420 = vld [vmem:[#allocation3 + $0x48] sm:$0xff]
    %v421 = vld [vmem:[#allocation3 + $0x50] sm:$0xff]
    %v422 = vld [vmem:[#allocation3 + $0x58] sm:$0xff]
    %v423 = vld [vmem:[#allocation3 + $0x60] sm:$0xff]
    %v424 = vld [vmem:[#allocation3 + $0x68] sm:$0xff]
    %v425 = vld [vmem:[#allocation3 + $0x70] sm:$0xff]
    %v426 = vld [vmem:[#allocation3 + $0x78] sm:$0xff]
    %v427 = vld [vmem:[#allocation3 + $0x80] sm:$0xff]
    %v428 = vld [vmem:[#allocation3 + $0x88] sm:$0xff]
    %v429 = vld [vmem:[#allocation3 + $0x90] sm:$0xff]
    %v430 = vld [vmem:[#allocation3 + $0x98] sm:$0xff]
    %v431 = vld [vmem:[#allocation3 + $0xa0] sm:$0xff]
    %v432 = vld [vmem:[#allocation3 + $0xa8] sm:$0xff]
    %v433 = vld [vmem:[#allocation3 + $0xb0] sm:$0xff]
    %v434 = vld [vmem:[#allocation3 + $0xb8] sm:$0xff]
    %v435 = vld [vmem:[#allocation3 + $0xc0] sm:$0xff]
    %v436 = vld [vmem:[#allocation3 + $0xc8] sm:$0xff]
    %v437 = vld [vmem:[#allocation3 + $0xd0] sm:$0xff]
    %v438 = vld [vmem:[#allocation3 + $0xd8] sm:$0xff]
    %v439 = vld [vmem:[#allocation3 + $0xe0] sm:$0xff]
    %v440 = vld [vmem:[#allocation3 + $0xe8] sm:$0xff]
    %v441 = vld [vmem:[#allocation3 + $0xf0] sm:$0xff]
    %v442 = vld [vmem:[#allocation3 + $0xf8] sm:$0xff]
    %v443 = vld [vmem:[#allocation3 + $0x100] sm:$0xff]
    %v444 = vld [vmem:[#allocation3 + $0x108] sm:$0xff]
    %v445 = vld [vmem:[#allocation3 + $0x110] sm:$0xff]
    %v446 = vld [vmem:[#allocation3 + $0x118] sm:$0xff]
    %v447 = vld [vmem:[#allocation3 + $0x120] sm:$0xff]
    %v448 = vld [vmem:[#allocation3 + $0x128] sm:$0xff]
    %v449 = vld [vmem:[#allocation3 + $0x130] sm:$0xff]
    %v450 = vld [vmem:[#allocation3 + $0x138] sm:$0xff]
    %v451 = vld [vmem:[#allocation3 + $0x140] sm:$0xff]
    %v452 = vld [vmem:[#allocation3 + $0x148] sm:$0xff]
    %v453 = vld [vmem:[#allocation3 + $0x150] sm:$0xff]
    %v454 = vld [vmem:[#allocation3 + $0x158] sm:$0xff]
    %v455 = vld [vmem:[#allocation3 + $0x160] sm:$0xff]
    %v456 = vld [vmem:[#allocation3 + $0x168] sm:$0xff]
    %v457 = vld [vmem:[#allocation3 + $0x170] sm:$0xff]
    %v458 = vld [vmem:[#allocation3 + $0x178] sm:$0xff]
    %459 = vmatpush.msra.mxu0 %v456
    %460 = vmatpush.msra.mxu0 %v453
    %461 = vmatpush.msra.mxu0 %v450
    %462 = vmatpush.msra.mxu0 %v447
    %463 = vmatpush.msra.mxu0 %v444
    %464 = vmatpush.msra.mxu0 %v441
    %465 = vmatpush.msra.mxu0 %v438
    %466 = vmatpush.msra.mxu0 %v435
    %467 = vmatpush.msra.mxu0 %v432
    %468 = vmatpush.msra.mxu0 %v429
    %469 = vmatpush.msra.mxu0 %v426
    %470 = vmatpush.msra.mxu0 %v423
    %471 = vmatpush.msra.mxu0 %v420
    %472 = vmatpush.msra.mxu0 %v417
    %473 = vmatpush.msra.mxu0 %v414
    %474 = vmatpush.msra.mxu0 %v411
    %475 = vmatmul.f32.gmra.mxu0 %v403
    %v476 = vpop.f32.mrf.mxu0
    %v477 = vadd.f32 0.0, %v476
    %478 = vdwg.mxu0
    %479 = vmatpush.msra.mxu0 %v457
    %480 = vmatpush.msra.mxu0 %v454
    %481 = vmatpush.msra.mxu0 %v451
    %482 = vmatpush.msra.mxu0 %v448
    %483 = vmatpush.msra.mxu0 %v445
    %484 = vmatpush.msra.mxu0 %v442
    %485 = vmatpush.msra.mxu0 %v439
    %486 = vmatpush.msra.mxu0 %v436
    %487 = vmatpush.msra.mxu0 %v433
    %488 = vmatpush.msra.mxu0 %v430
    %489 = vmatpush.msra.mxu0 %v427
    %490 = vmatpush.msra.mxu0 %v424
    %491 = vmatpush.msra.mxu0 %v421
    %492 = vmatpush.msra.mxu0 %v418
    %493 = vmatpush.msra.mxu0 %v415
    %494 = vmatpush.msra.mxu0 %v412
    %495 = vmatmul.f32.gmra.mxu0 %v403
    %v496 = vpop.f32.mrf.mxu0
    %v497 = vadd.f32 0.0, %v496
    %498 = vdwg.mxu0
    %499 = vmatpush.msra.mxu0 %v458
    %500 = vmatpush.msra.mxu0 %v455
    %501 = vmatpush.msra.mxu0 %v452
    %502 = vmatpush.msra.mxu0 %v449
    %503 = vmatpush.msra.mxu0 %v446
    %504 = vmatpush.msra.mxu0 %v443
    %505 = vmatpush.msra.mxu0 %v440
    %506 = vmatpush.msra.mxu0 %v437
    %507 = vmatpush.msra.mxu0 %v434
    %508 = vmatpush.msra.mxu0 %v431
    %509 = vmatpush.msra.mxu0 %v428
    %510 = vmatpush.msra.mxu0 %v425
    %511 = vmatpush.msra.mxu0 %v422
    %512 = vmatpush.msra.mxu0 %v419
    %513 = vmatpush.msra.mxu0 %v416
    %514 = vmatpush.msra.mxu0 %v413
    %515 = vmatmul.f32.gmra.mxu0 %v403
    %v516 = vpop.f32.mrf.mxu0
    %v517 = vadd.f32 0.0, %v516
    %518 = vdwg.mxu0
    %v519 = vadd.f32 %v408, %v477
    %v520 = vxor.u32 %v519, 2147483648
    %v521 = vmul.f32 %v520, 1.442695
    %v522 = vpow.pop %v521
    %v523 = vadd.f32 %v522, 1.0
    %v524 = vrcp.pop %v523
    %v525 = vmul.f32 %v523, %v524
    %v526 = vsub.f32 1.0, %v525
    %v527 = vmul.f32 %v524, %v526
    %v528 = vadd.f32 %v524, %v527
    %vm529 = vweird.f32 %v523
    %vm530 = vweird.f32 %v524
    %vm531 = vmor %vm529, %vm530
    %v532 = vsel %vm531, %v524, %v528
    %v533 = vand.u32 2147483647, %v523
    %vm534 = vcmp.eq.f32.partialorder %v533, 8.507059e+37
    %v535 = vand.u32 %v523, 2147483648
    %v536 = vor.u32 1.1754944e-38, %v535
    %v537 = vsel %vm534, %v536, %v532
    %v538 = vmul.f32 1.0, %v537
    %v539 = vadd.f32 %v409, %v497
    %v540 = vxor.u32 %v539, 2147483648
    %v541 = vmul.f32 %v540, 1.442695
    %v542 = vpow.pop %v541
    %v543 = vadd.f32 %v542, 1.0
    %v544 = vrcp.pop %v543
    %v545 = vmul.f32 %v543, %v544
    %v546 = vsub.f32 1.0, %v545
    %v547 = vmul.f32 %v544, %v546
    %v548 = vadd.f32 %v544, %v547
    %vm549 = vweird.f32 %v543
    %vm550 = vweird.f32 %v544
    %vm551 = vmor %vm549, %vm550
    %v552 = vsel %vm551, %v544, %v548
    %v553 = vand.u32 2147483647, %v543
    %vm554 = vcmp.eq.f32.partialorder %v553, 8.507059e+37
    %v555 = vand.u32 %v543, 2147483648
    %v556 = vor.u32 1.1754944e-38, %v555
    %v557 = vsel %vm554, %v556, %v552
    %v558 = vmul.f32 1.0, %v557
    %v559 = vadd.f32 %v517, %v240
    %v560 = vmul.f32 %v538, %v559
    %v561 = vadd.f32 %v410, %v560
    %v562 = vtanh.pop %v561
    %v563 = vsub.f32 1.0, %v558
    %v564 = vmul.f32 %v563, %v562
    %v565 = vmul.f32 %v558, %v403
    %v566 = vadd.f32 %v564, %v565
    %s567 = scalar_lea.vmem [#allocation6], 8
    %568 = vst [vmem:[%s567] sm:$0xff] %v566
    %s569 = smul.u32 2, 3
    %s570 = smul.addr %s569, 8
    %s571 = scalar_lea.vmem [#allocation2], %s570
    %v572 = vld [vmem:[%s571] sm:$0xff]
    %v573 = vld [vmem:[%s571 + $0x8] sm:$0xff]
    %v574 = vld [vmem:[%s571 + $0x10] sm:$0xff]
    %v575 = vld [vmem:[#allocation3] sm:$0xff]
    %v576 = vld [vmem:[#allocation3 + $0x8] sm:$0xff]
    %v577 = vld [vmem:[#allocation3 + $0x10] sm:$0xff]
    %v578 = vld [vmem:[#allocation3 + $0x18] sm:$0xff]
    %v579 = vld [vmem:[#allocation3 + $0x20] sm:$0xff]
    %v580 = vld [vmem:[#allocation3 + $0x28] sm:$0xff]
    %v581 = vld [vmem:[#allocation3 + $0x30] sm:$0xff]
    %v582 = vld [vmem:[#allocation3 + $0x38] sm:$0xff]
    %v583 = vld [vmem:[#allocation3 + $0x40] sm:$0xff]
    %v584 = vld [vmem:[#allocation3 + $0x48] sm:$0xff]
    %v585 = vld [vmem:[#allocation3 + $0x50] sm:$0xff]
    %v586 = vld [vmem:[#allocation3 + $0x58] sm:$0xff]
    %v587 = vld [vmem:[#allocation3 + $0x60] sm:$0xff]
    %v588 = vld [vmem:[#allocation3 + $0x68] sm:$0xff]
    %v589 = vld [vmem:[#allocation3 + $0x70] sm:$0xff]
    %v590 = vld [vmem:[#allocation3 + $0x78] sm:$0xff]
    %v591 = vld [vmem:[#allocation3 + $0x80] sm:$0xff]
    %v592 = vld [vmem:[#allocation3 + $0x88] sm:$0xff]
    %v593 = vld [vmem:[#allocation3 + $0x90] sm:$0xff]
    %v594 = vld [vmem:[#allocation3 + $0x98] sm:$0xff]
    %v595 = vld [vmem:[#allocation3 + $0xa0] sm:$0xff]
    %v596 = vld [vmem:[#allocation3 + $0xa8] sm:$0xff]
    %v597 = vld [vmem:[#allocation3 + $0xb0] sm:$0xff]
    %v598 = vld [vmem:[#allocation3 + $0xb8] sm:$0xff]
    %v599 = vld [vmem:[#allocation3 + $0xc0] sm:$0xff]
    %v600 = vld [vmem:[#allocation3 + $0xc8] sm:$0xff]
    %v601 = vld [vmem:[#allocation3 + $0xd0] sm:$0xff]
    %v602 = vld [vmem:[#allocation3 + $0xd8] sm:$0xff]
    %v603 = vld [vmem:[#allocation3 + $0xe0] sm:$0xff]
    %v604 = vld [vmem:[#allocation3 + $0xe8] sm:$0xff]
    %v605 = vld [vmem:[#allocation3 + $0xf0] sm:$0xff]
    %v606 = vld [vmem:[#allocation3 + $0xf8] sm:$0xff]
    %v607 = vld [vmem:[#allocation3 + $0x100] sm:$0xff]
    %v608 = vld [vmem:[#allocation3 + $0x108] sm:$0xff]
    %v609 = vld [vmem:[#allocation3 + $0x110] sm:$0xff]
    %v610 = vld [vmem:[#allocation3 + $0x118] sm:$0xff]
    %v611 = vld [vmem:[#allocation3 + $0x120] sm:$0xff]
    %v612 = vld [vmem:[#allocation3 + $0x128] sm:$0xff]
    %v613 = vld [vmem:[#allocation3 + $0x130] sm:$0xff]
    %v614 = vld [vmem:[#allocation3 + $0x138] sm:$0xff]
    %v615 = vld [vmem:[#allocation3 + $0x140] sm:$0xff]
    %v616 = vld [vmem:[#allocation3 + $0x148] sm:$0xff]
    %v617 = vld [vmem:[#allocation3 + $0x150] sm:$0xff]
    %v618 = vld [vmem:[#allocation3 + $0x158] sm:$0xff]
    %v619 = vld [vmem:[#allocation3 + $0x160] sm:$0xff]
    %v620 = vld [vmem:[#allocation3 + $0x168] sm:$0xff]
    %v621 = vld [vmem:[#allocation3 + $0x170] sm:$0xff]
    %v622 = vld [vmem:[#allocation3 + $0x178] sm:$0xff]
    %623 = vmatpush.msra.mxu0 %v620
    %624 = vmatpush.msra.mxu0 %v617
    %625 = vmatpush.msra.mxu0 %v614
    %626 = vmatpush.msra.mxu0 %v611
    %627 = vmatpush.msra.mxu0 %v608
    %628 = vmatpush.msra.mxu0 %v605
    %629 = vmatpush.msra.mxu0 %v602
    %630 = vmatpush.msra.mxu0 %v599
    %631 = vmatpush.msra.mxu0 %v596
    %632 = vmatpush.msra.mxu0 %v593
    %633 = vmatpush.msra.mxu0 %v590
    %634 = vmatpush.msra.mxu0 %v587
    %635 = vmatpush.msra.mxu0 %v584
    %636 = vmatpush.msra.mxu0 %v581
    %637 = vmatpush.msra.mxu0 %v578
    %638 = vmatpush.msra.mxu0 %v575
    %639 = vmatmul.f32.gmra.mxu0 %v566
    %v640 = vpop.f32.mrf.mxu0
    %v641 = vadd.f32 0.0, %v640
    %642 = vdwg.mxu0
    %643 = vmatpush.msra.mxu0 %v621
    %644 = vmatpush.msra.mxu0 %v618
    %645 = vmatpush.msra.mxu0 %v615
    %646 = vmatpush.msra.mxu0 %v612
    %647 = vmatpush.msra.mxu0 %v609
    %648 = vmatpush.msra.mxu0 %v606
    %649 = vmatpush.msra.mxu0 %v603
    %650 = vmatpush.msra.mxu0 %v600
    %651 = vmatpush.msra.mxu0 %v597
    %652 = vmatpush.msra.mxu0 %v594
    %653 = vmatpush.msra.mxu0 %v591
    %654 = vmatpush.msra.mxu0 %v588
    %655 = vmatpush.msra.mxu0 %v585
    %656 = vmatpush.msra.mxu0 %v582
    %657 = vmatpush.msra.mxu0 %v579
    %658 = vmatpush.msra.mxu0 %v576
    %659 = vmatmul.f32.gmra.mxu0 %v566
    %v660 = vpop.f32.mrf.mxu0
    %v661 = vadd.f32 0.0, %v660
    %662 = vdwg.mxu0
    %663 = vmatpush.msra.mxu0 %v622
    %664 = vmatpush.msra.mxu0 %v619
    %665 = vmatpush.msra.mxu0 %v616
    %666 = vmatpush.msra.mxu0 %v613
    %667 = vmatpush.msra.mxu0 %v610
    %668 = vmatpush.msra.mxu0 %v607
    %669 = vmatpush.msra.mxu0 %v604
    %670 = vmatpush.msra.mxu0 %v601
    %671 = vmatpush.msra.mxu0 %v598
    %672 = vmatpush.msra.mxu0 %v595
    %673 = vmatpush.msra.mxu0 %v592
    %674 = vmatpush.msra.mxu0 %v589
    %675 = vmatpush.msra.mxu0 %v586
    %676 = vmatpush.msra.mxu0 %v583
    %677 = vmatpush.msra.mxu0 %v580
    %678 = vmatpush.msra.mxu0 %v577
    %679 = vmatmul.f32.gmra.mxu0 %v566
    %v680 = vpop.f32.mrf.mxu0
    %v681 = vadd.f32 0.0, %v680
    %682 = vdwg.mxu0
    %v683 = vadd.f32 %v572, %v641
    %v684 = vxor.u32 %v683, 2147483648
    %v685 = vmul.f32 %v684, 1.442695
    %v686 = vpow.pop %v685
    %v687 = vadd.f32 %v686, 1.0
    %v688 = vrcp.pop %v687
    %v689 = vmul.f32 %v687, %v688
    %v690 = vsub.f32 1.0, %v689
    %v691 = vmul.f32 %v688, %v690
    %v692 = vadd.f32 %v688, %v691
    %vm693 = vweird.f32 %v687
    %vm694 = vweird.f32 %v688
    %vm695 = vmor %vm693, %vm694
    %v696 = vsel %vm695, %v688, %v692
    %v697 = vand.u32 2147483647, %v687
    %vm698 = vcmp.eq.f32.partialorder %v697, 8.507059e+37
    %v699 = vand.u32 %v687, 2147483648
    %v700 = vor.u32 1.1754944e-38, %v699
    %v701 = vsel %vm698, %v700, %v696
    %v702 = vmul.f32 1.0, %v701
    %v703 = vadd.f32 %v573, %v661
    %v704 = vxor.u32 %v703, 2147483648
    %v705 = vmul.f32 %v704, 1.442695
    %v706 = vpow.pop %v705
    %v707 = vadd.f32 %v706, 1.0
    %v708 = vrcp.pop %v707
    %v709 = vmul.f32 %v707, %v708
    %v710 = vsub.f32 1.0, %v709
    %v711 = vmul.f32 %v708, %v710
    %v712 = vadd.f32 %v708, %v711
    %vm713 = vweird.f32 %v707
    %vm714 = vweird.f32 %v708
    %vm715 = vmor %vm713, %vm714
    %v716 = vsel %vm715, %v708, %v712
    %v717 = vand.u32 2147483647, %v707
    %vm718 = vcmp.eq.f32.partialorder %v717, 8.507059e+37
    %v719 = vand.u32 %v707, 2147483648
    %v720 = vor.u32 1.1754944e-38, %v719
    %v721 = vsel %vm718, %v720, %v716
    %v722 = vmul.f32 1.0, %v721
    %v723 = vadd.f32 %v681, %v240
    %v724 = vmul.f32 %v702, %v723
    %v725 = vadd.f32 %v574, %v724
    %v726 = vtanh.pop %v725
    %v727 = vsub.f32 1.0, %v722
    %v728 = vmul.f32 %v727, %v726
    %v729 = vmul.f32 %v722, %v566
    %v730 = vadd.f32 %v728, %v729
    %s731 = scalar_lea.vmem [#allocation6], 16
    %732 = vst [vmem:[%s731] sm:$0xff] %v730
    %s733 = smul.u32 3, 3
    %s734 = smul.addr %s733, 8
    %s735 = scalar_lea.vmem [#allocation2], %s734
    %v736 = vld [vmem:[%s735] sm:$0xff]
    %v737 = vld [vmem:[%s735 + $0x8] sm:$0xff]
    %v738 = vld [vmem:[%s735 + $0x10] sm:$0xff]
    %v739 = vld [vmem:[#allocation3] sm:$0xff]
    %v740 = vld [vmem:[#allocation3 + $0x8] sm:$0xff]
    %v741 = vld [vmem:[#allocation3 + $0x10] sm:$0xff]
    %v742 = vld [vmem:[#allocation3 + $0x18] sm:$0xff]
    %v743 = vld [vmem:[#allocation3 + $0x20] sm:$0xff]
    %v744 = vld [vmem:[#allocation3 + $0x28] sm:$0xff]
    %v745 = vld [vmem:[#allocation3 + $0x30] sm:$0xff]
    %v746 = vld [vmem:[#allocation3 + $0x38] sm:$0xff]
    %v747 = vld [vmem:[#allocation3 + $0x40] sm:$0xff]
    %v748 = vld [vmem:[#allocation3 + $0x48] sm:$0xff]
    %v749 = vld [vmem:[#allocation3 + $0x50] sm:$0xff]
    %v750 = vld [vmem:[#allocation3 + $0x58] sm:$0xff]
    %v751 = vld [vmem:[#allocation3 + $0x60] sm:$0xff]
    %v752 = vld [vmem:[#allocation3 + $0x68] sm:$0xff]
    %v753 = vld [vmem:[#allocation3 + $0x70] sm:$0xff]
    %v754 = vld [vmem:[#allocation3 + $0x78] sm:$0xff]
    %v755 = vld [vmem:[#allocation3 + $0x80] sm:$0xff]
    %v756 = vld [vmem:[#allocation3 + $0x88] sm:$0xff]
    %v757 = vld [vmem:[#allocation3 + $0x90] sm:$0xff]
    %v758 = vld [vmem:[#allocation3 + $0x98] sm:$0xff]
    %v759 = vld [vmem:[#allocation3 + $0xa0] sm:$0xff]
    %v760 = vld [vmem:[#allocation3 + $0xa8] sm:$0xff]
    %v761 = vld [vmem:[#allocation3 + $0xb0] sm:$0xff]
    %v762 = vld [vmem:[#allocation3 + $0xb8] sm:$0xff]
    %v763 = vld [vmem:[#allocation3 + $0xc0] sm:$0xff]
    %v764 = vld [vmem:[#allocation3 + $0xc8] sm:$0xff]
    %v765 = vld [vmem:[#allocation3 + $0xd0] sm:$0xff]
    %v766 = vld [vmem:[#allocation3 + $0xd8] sm:$0xff]
    %v767 = vld [vmem:[#allocation3 + $0xe0] sm:$0xff]
    %v768 = vld [vmem:[#allocation3 + $0xe8] sm:$0xff]
    %v769 = vld [vmem:[#allocation3 + $0xf0] sm:$0xff]
    %v770 = vld [vmem:[#allocation3 + $0xf8] sm:$0xff]
    %v771 = vld [vmem:[#allocation3 + $0x100] sm:$0xff]
    %v772 = vld [vmem:[#allocation3 + $0x108] sm:$0xff]
    %v773 = vld [vmem:[#allocation3 + $0x110] sm:$0xff]
    %v774 = vld [vmem:[#allocation3 + $0x118] sm:$0xff]
    %v775 = vld [vmem:[#allocation3 + $0x120] sm:$0xff]
    %v776 = vld [vmem:[#allocation3 + $0x128] sm:$0xff]
    %v777 = vld [vmem:[#allocation3 + $0x130] sm:$0xff]
    %v778 = vld [vmem:[#allocation3 + $0x138] sm:$0xff]
    %v779 = vld [vmem:[#allocation3 + $0x140] sm:$0xff]
    %v780 = vld [vmem:[#allocation3 + $0x148] sm:$0xff]
    %v781 = vld [vmem:[#allocation3 + $0x150] sm:$0xff]
    %v782 = vld [vmem:[#allocation3 + $0x158] sm:$0xff]
    %v783 = vld [vmem:[#allocation3 + $0x160] sm:$0xff]
    %v784 = vld [vmem:[#allocation3 + $0x168] sm:$0xff]
    %v785 = vld [vmem:[#allocation3 + $0x170] sm:$0xff]
    %v786 = vld [vmem:[#allocation3 + $0x178] sm:$0xff]
    %787 = vmatpush.msra.mxu0 %v784
    %788 = vmatpush.msra.mxu0 %v781
    %789 = vmatpush.msra.mxu0 %v778
    %790 = vmatpush.msra.mxu0 %v775
    %791 = vmatpush.msra.mxu0 %v772
    %792 = vmatpush.msra.mxu0 %v769
    %793 = vmatpush.msra.mxu0 %v766
    %794 = vmatpush.msra.mxu0 %v763
    %795 = vmatpush.msra.mxu0 %v760
    %796 = vmatpush.msra.mxu0 %v757
    %797 = vmatpush.msra.mxu0 %v754
    %798 = vmatpush.msra.mxu0 %v751
    %799 = vmatpush.msra.mxu0 %v748
    %800 = vmatpush.msra.mxu0 %v745
    %801 = vmatpush.msra.mxu0 %v742
    %802 = vmatpush.msra.mxu0 %v739
    %803 = vmatmul.f32.gmra.mxu0 %v730
    %v804 = vpop.f32.mrf.mxu0
    %v805 = vadd.f32 0.0, %v804
    %806 = vdwg.mxu0
    %807 = vmatpush.msra.mxu0 %v785
    %808 = vmatpush.msra.mxu0 %v782
    %809 = vmatpush.msra.mxu0 %v779
    %810 = vmatpush.msra.mxu0 %v776
    %811 = vmatpush.msra.mxu0 %v773
    %812 = vmatpush.msra.mxu0 %v770
    %813 = vmatpush.msra.mxu0 %v767
    %814 = vmatpush.msra.mxu0 %v764
    %815 = vmatpush.msra.mxu0 %v761
    %816 = vmatpush.msra.mxu0 %v758
    %817 = vmatpush.msra.mxu0 %v755
    %818 = vmatpush.msra.mxu0 %v752
    %819 = vmatpush.msra.mxu0 %v749
    %820 = vmatpush.msra.mxu0 %v746
    %821 = vmatpush.msra.mxu0 %v743
    %822 = vmatpush.msra.mxu0 %v740
    %823 = vmatmul.f32.gmra.mxu0 %v730
    %v824 = vpop.f32.mrf.mxu0
    %v825 = vadd.f32 0.0, %v824
    %826 = vdwg.mxu0
    %827 = vmatpush.msra.mxu0 %v786
    %828 = vmatpush.msra.mxu0 %v783
    %829 = vmatpush.msra.mxu0 %v780
    %830 = vmatpush.msra.mxu0 %v777
    %831 = vmatpush.msra.mxu0 %v774
    %832 = vmatpush.msra.mxu0 %v771
    %833 = vmatpush.msra.mxu0 %v768
    %834 = vmatpush.msra.mxu0 %v765
    %835 = vmatpush.msra.mxu0 %v762
    %836 = vmatpush.msra.mxu0 %v759
    %837 = vmatpush.msra.mxu0 %v756
    %838 = vmatpush.msra.mxu0 %v753
    %839 = vmatpush.msra.mxu0 %v750
    %840 = vmatpush.msra.mxu0 %v747
    %841 = vmatpush.msra.mxu0 %v744
    %842 = vmatpush.msra.mxu0 %v741
    %843 = vmatmul.f32.gmra.mxu0 %v730
    %v844 = vpop.f32.mrf.mxu0
    %v845 = vadd.f32 0.0, %v844
    %846 = vdwg.mxu0
    %v847 = vadd.f32 %v736, %v805
    %v848 = vxor.u32 %v847, 2147483648
    %v849 = vmul.f32 %v848, 1.442695
    %v850 = vpow.pop %v849
    %v851 = vadd.f32 %v850, 1.0
    %v852 = vrcp.pop %v851
    %v853 = vmul.f32 %v851, %v852
    %v854 = vsub.f32 1.0, %v853
    %v855 = vmul.f32 %v852, %v854
    %v856 = vadd.f32 %v852, %v855
    %vm857 = vweird.f32 %v851
    %vm858 = vweird.f32 %v852
    %vm859 = vmor %vm857, %vm858
    %v860 = vsel %vm859, %v852, %v856
    %v861 = vand.u32 2147483647, %v851
    %vm862 = vcmp.eq.f32.partialorder %v861, 8.507059e+37
    %v863 = vand.u32 %v851, 2147483648
    %v864 = vor.u32 1.1754944e-38, %v863
    %v865 = vsel %vm862, %v864, %v860
    %v866 = vmul.f32 1.0, %v865
    %v867 = vadd.f32 %v737, %v825
    %v868 = vxor.u32 %v867, 2147483648
    %v869 = vmul.f32 %v868, 1.442695
    %v870 = vpow.pop %v869
    %v871 = vadd.f32 %v870, 1.0
    %v872 = vrcp.pop %v871
    %v873 = vmul.f32 %v871, %v872
    %v874 = vsub.f32 1.0, %v873
    %v875 = vmul.f32 %v872, %v874
    %v876 = vadd.f32 %v872, %v875
    %vm877 = vweird.f32 %v871
    %vm878 = vweird.f32 %v872
    %vm879 = vmor %vm877, %vm878
    %v880 = vsel %vm879, %v872, %v876
    %v881 = vand.u32 2147483647, %v871
    %vm882 = vcmp.eq.f32.partialorder %v881, 8.507059e+37
    %v883 = vand.u32 %v871, 2147483648
    %v884 = vor.u32 1.1754944e-38, %v883
    %v885 = vsel %vm882, %v884, %v880
    %v886 = vmul.f32 1.0, %v885
    %v887 = vadd.f32 %v845, %v240
    %v888 = vmul.f32 %v866, %v887
    %v889 = vadd.f32 %v738, %v888
    %v890 = vtanh.pop %v889
    %v891 = vsub.f32 1.0, %v886
    %v892 = vmul.f32 %v891, %v890
    %v893 = vmul.f32 %v886, %v730
    %v894 = vadd.f32 %v892, %v893
    %s895 = scalar_lea.vmem [#allocation6], 24
    %896 = vst [vmem:[%s895] sm:$0xff] %v894
    %s897 = smul.u32 4, 3
    %s898 = smul.addr %s897, 8
    %s899 = scalar_lea.vmem [#allocation2], %s898
    %v900 = vld [vmem:[%s899] sm:$0xff]
    %v901 = vld [vmem:[%s899 + $0x8] sm:$0xff]
    %v902 = vld [vmem:[%s899 + $0x10] sm:$0xff]
    %v903 = vld [vmem:[#allocation3] sm:$0xff]
    %v904 = vld [vmem:[#allocation3 + $0x8] sm:$0xff]
    %v905 = vld [vmem:[#allocation3 + $0x10] sm:$0xff]
    %v906 = vld [vmem:[#allocation3 + $0x18] sm:$0xff]
    %v907 = vld [vmem:[#allocation3 + $0x20] sm:$0xff]
    %v908 = vld [vmem:[#allocation3 + $0x28] sm:$0xff]
    %v909 = vld [vmem:[#allocation3 + $0x30] sm:$0xff]
    %v910 = vld [vmem:[#allocation3 + $0x38] sm:$0xff]
    %v911 = vld [vmem:[#allocation3 + $0x40] sm:$0xff]
    %v912 = vld [vmem:[#allocation3 + $0x48] sm:$0xff]
    %v913 = vld [vmem:[#allocation3 + $0x50] sm:$0xff]
    %v914 = vld [vmem:[#allocation3 + $0x58] sm:$0xff]
    %v915 = vld [vmem:[#allocation3 + $0x60] sm:$0xff]
    %v916 = vld [vmem:[#allocation3 + $0x68] sm:$0xff]
    %v917 = vld [vmem:[#allocation3 + $0x70] sm:$0xff]
    %v918 = vld [vmem:[#allocation3 + $0x78] sm:$0xff]
    %v919 = vld [vmem:[#allocation3 + $0x80] sm:$0xff]
    %v920 = vld [vmem:[#allocation3 + $0x88] sm:$0xff]
    %v921 = vld [vmem:[#allocation3 + $0x90] sm:$0xff]
    %v922 = vld [vmem:[#allocation3 + $0x98] sm:$0xff]
    %v923 = vld [vmem:[#allocation3 + $0xa0] sm:$0xff]
    %v924 = vld [vmem:[#allocation3 + $0xa8] sm:$0xff]
    %v925 = vld [vmem:[#allocation3 + $0xb0] sm:$0xff]
    %v926 = vld [vmem:[#allocation3 + $0xb8] sm:$0xff]
    %v927 = vld [vmem:[#allocation3 + $0xc0] sm:$0xff]
    %v928 = vld [vmem:[#allocation3 + $0xc8] sm:$0xff]
    %v929 = vld [vmem:[#allocation3 + $0xd0] sm:$0xff]
    %v930 = vld [vmem:[#allocation3 + $0xd8] sm:$0xff]
    %v931 = vld [vmem:[#allocation3 + $0xe0] sm:$0xff]
    %v932 = vld [vmem:[#allocation3 + $0xe8] sm:$0xff]
    %v933 = vld [vmem:[#allocation3 + $0xf0] sm:$0xff]
    %v934 = vld [vmem:[#allocation3 + $0xf8] sm:$0xff]
    %v935 = vld [vmem:[#allocation3 + $0x100] sm:$0xff]
    %v936 = vld [vmem:[#allocation3 + $0x108] sm:$0xff]
    %v937 = vld [vmem:[#allocation3 + $0x110] sm:$0xff]
    %v938 = vld [vmem:[#allocation3 + $0x118] sm:$0xff]
    %v939 = vld [vmem:[#allocation3 + $0x120] sm:$0xff]
    %v940 = vld [vmem:[#allocation3 + $0x128] sm:$0xff]
    %v941 = vld [vmem:[#allocation3 + $0x130] sm:$0xff]
    %v942 = vld [vmem:[#allocation3 + $0x138] sm:$0xff]
    %v943 = vld [vmem:[#allocation3 + $0x140] sm:$0xff]
    %v944 = vld [vmem:[#allocation3 + $0x148] sm:$0xff]
    %v945 = vld [vmem:[#allocation3 + $0x150] sm:$0xff]
    %v946 = vld [vmem:[#allocation3 + $0x158] sm:$0xff]
    %v947 = vld [vmem:[#allocation3 + $0x160] sm:$0xff]
    %v948 = vld [vmem:[#allocation3 + $0x168] sm:$0xff]
    %v949 = vld [vmem:[#allocation3 + $0x170] sm:$0xff]
    %v950 = vld [vmem:[#allocation3 + $0x178] sm:$0xff]
    %951 = vmatpush.msra.mxu0 %v948
    %952 = vmatpush.msra.mxu0 %v945
    %953 = vmatpush.msra.mxu0 %v942
    %954 = vmatpush.msra.mxu0 %v939
    %955 = vmatpush.msra.mxu0 %v936
    %956 = vmatpush.msra.mxu0 %v933
    %957 = vmatpush.msra.mxu0 %v930
    %958 = vmatpush.msra.mxu0 %v927
    %959 = vmatpush.msra.mxu0 %v924
    %960 = vmatpush.msra.mxu0 %v921
    %961 = vmatpush.msra.mxu0 %v918
    %962 = vmatpush.msra.mxu0 %v915
    %963 = vmatpush.msra.mxu0 %v912
    %964 = vmatpush.msra.mxu0 %v909
    %965 = vmatpush.msra.mxu0 %v906
    %966 = vmatpush.msra.mxu0 %v903
    %967 = vmatmul.f32.gmra.mxu0 %v894
    %v968 = vpop.f32.mrf.mxu0
    %v969 = vadd.f32 0.0, %v968
    %970 = vdwg.mxu0
    %971 = vmatpush.msra.mxu0 %v949
    %972 = vmatpush.msra.mxu0 %v946
    %973 = vmatpush.msra.mxu0 %v943
    %974 = vmatpush.msra.mxu0 %v940
    %975 = vmatpush.msra.mxu0 %v937
    %976 = vmatpush.msra.mxu0 %v934
    %977 = vmatpush.msra.mxu0 %v931
    %978 = vmatpush.msra.mxu0 %v928
    %979 = vmatpush.msra.mxu0 %v925
    %980 = vmatpush.msra.mxu0 %v922
    %981 = vmatpush.msra.mxu0 %v919
    %982 = vmatpush.msra.mxu0 %v916
    %983 = vmatpush.msra.mxu0 %v913
    %984 = vmatpush.msra.mxu0 %v910
    %985 = vmatpush.msra.mxu0 %v907
    %986 = vmatpush.msra.mxu0 %v904
    %987 = vmatmul.f32.gmra.mxu0 %v894
    %v988 = vpop.f32.mrf.mxu0
    %v989 = vadd.f32 0.0, %v988
    %990 = vdwg.mxu0
    %991 = vmatpush.msra.mxu0 %v950
    %992 = vmatpush.msra.mxu0 %v947
    %993 = vmatpush.msra.mxu0 %v944
    %994 = vmatpush.msra.mxu0 %v941
    %995 = vmatpush.msra.mxu0 %v938
    %996 = vmatpush.msra.mxu0 %v935
    %997 = vmatpush.msra.mxu0 %v932
    %998 = vmatpush.msra.mxu0 %v929
    %999 = vmatpush.msra.mxu0 %v926
    %1000 = vmatpush.msra.mxu0 %v923
    %1001 = vmatpush.msra.mxu0 %v920
    %1002 = vmatpush.msra.mxu0 %v917
    %1003 = vmatpush.msra.mxu0 %v914
    %1004 = vmatpush.msra.mxu0 %v911
    %1005 = vmatpush.msra.mxu0 %v908
    %1006 = vmatpush.msra.mxu0 %v905
    %1007 = vmatmul.f32.gmra.mxu0 %v894
    %v1008 = vpop.f32.mrf.mxu0
    %v1009 = vadd.f32 0.0, %v1008
    %1010 = vdwg.mxu0
    %v1011 = vadd.f32 %v900, %v969
    %v1012 = vxor.u32 %v1011, 2147483648
    %v1013 = vmul.f32 %v1012, 1.442695
    %v1014 = vpow.pop %v1013
    %v1015 = vadd.f32 %v1014, 1.0
    %v1016 = vrcp.pop %v1015
    %v1017 = vmul.f32 %v1015, %v1016
    %v1018 = vsub.f32 1.0, %v1017
    %v1019 = vmul.f32 %v1016, %v1018
    %v1020 = vadd.f32 %v1016, %v1019
    %vm1021 = vweird.f32 %v1015
    %vm1022 = vweird.f32 %v1016
    %vm1023 = vmor %vm1021, %vm1022
    %v1024 = vsel %vm1023, %v1016, %v1020
    %v1025 = vand.u32 2147483647, %v1015
    %vm1026 = vcmp.eq.f32.partialorder %v1025, 8.507059e+37
    %v1027 = vand.u32 %v1015, 2147483648
    %v1028 = vor.u32 1.1754944e-38, %v1027
    %v1029 = vsel %vm1026, %v1028, %v1024
    %v1030 = vmul.f32 1.0, %v1029
    %v1031 = vadd.f32 %v901, %v989
    %v1032 = vxor.u32 %v1031, 2147483648
    %v1033 = vmul.f32 %v1032, 1.442695
    %v1034 = vpow.pop %v1033
    %v1035 = vadd.f32 %v1034, 1.0
    %v1036 = vrcp.pop %v1035
    %v1037 = vmul.f32 %v1035, %v1036
    %v1038 = vsub.f32 1.0, %v1037
    %v1039 = vmul.f32 %v1036, %v1038
    %v1040 = vadd.f32 %v1036, %v1039
    %vm1041 = vweird.f32 %v1035
    %vm1042 = vweird.f32 %v1036
    %vm1043 = vmor %vm1041, %vm1042
    %v1044 = vsel %vm1043, %v1036, %v1040
    %v1045 = vand.u32 2147483647, %v1035
    %vm1046 = vcmp.eq.f32.partialorder %v1045, 8.507059e+37
    %v1047 = vand.u32 %v1035, 2147483648
    %v1048 = vor.u32 1.1754944e-38, %v1047
    %v1049 = vsel %vm1046, %v1048, %v1044
    %v1050 = vmul.f32 1.0, %v1049
    %v1051 = vadd.f32 %v1009, %v240
    %v1052 = vmul.f32 %v1030, %v1051
    %v1053 = vadd.f32 %v902, %v1052
    %v1054 = vtanh.pop %v1053
    %v1055 = vsub.f32 1.0, %v1050
    %v1056 = vmul.f32 %v1055, %v1054
    %v1057 = vmul.f32 %v1050, %v894
    %v1058 = vadd.f32 %v1056, %v1057
    %s1059 = scalar_lea.vmem [#allocation6], 32
    %1060 = vst [vmem:[%s1059] sm:$0xff] %v1058
    %s1061 = smul.u32 5, 3
    %s1062 = smul.addr %s1061, 8
    %s1063 = scalar_lea.vmem [#allocation2], %s1062
    %v1064 = vld [vmem:[%s1063] sm:$0xff]
    %v1065 = vld [vmem:[%s1063 + $0x8] sm:$0xff]
    %v1066 = vld [vmem:[%s1063 + $0x10] sm:$0xff]
    %v1067 = vld [vmem:[#allocation3] sm:$0xff]
    %v1068 = vld [vmem:[#allocation3 + $0x8] sm:$0xff]
    %v1069 = vld [vmem:[#allocation3 + $0x10] sm:$0xff]
    %v1070 = vld [vmem:[#allocation3 + $0x18] sm:$0xff]
    %v1071 = vld [vmem:[#allocation3 + $0x20] sm:$0xff]
    %v1072 = vld [vmem:[#allocation3 + $0x28] sm:$0xff]
    %v1073 = vld [vmem:[#allocation3 + $0x30] sm:$0xff]
    %v1074 = vld [vmem:[#allocation3 + $0x38] sm:$0xff]
    %v1075 = vld [vmem:[#allocation3 + $0x40] sm:$0xff]
    %v1076 = vld [vmem:[#allocation3 + $0x48] sm:$0xff]
    %v1077 = vld [vmem:[#allocation3 + $0x50] sm:$0xff]
    %v1078 = vld [vmem:[#allocation3 + $0x58] sm:$0xff]
    %v1079 = vld [vmem:[#allocation3 + $0x60] sm:$0xff]
    %v1080 = vld [vmem:[#allocation3 + $0x68] sm:$0xff]
    %v1081 = vld [vmem:[#allocation3 + $0x70] sm:$0xff]
    %v1082 = vld [vmem:[#allocation3 + $0x78] sm:$0xff]
    %v1083 = vld [vmem:[#allocation3 + $0x80] sm:$0xff]
    %v1084 = vld [vmem:[#allocation3 + $0x88] sm:$0xff]
    %v1085 = vld [vmem:[#allocation3 + $0x90] sm:$0xff]
    %v1086 = vld [vmem:[#allocation3 + $0x98] sm:$0xff]
    %v1087 = vld [vmem:[#allocation3 + $0xa0] sm:$0xff]
    %v1088 = vld [vmem:[#allocation3 + $0xa8] sm:$0xff]
    %v1089 = vld [vmem:[#allocation3 + $0xb0] sm:$0xff]
    %v1090 = vld [vmem:[#allocation3 + $0xb8] sm:$0xff]
    %v1091 = vld [vmem:[#allocation3 + $0xc0] sm:$0xff]
    %v1092 = vld [vmem:[#allocation3 + $0xc8] sm:$0xff]
    %v1093 = vld [vmem:[#allocation3 + $0xd0] sm:$0xff]
    %v1094 = vld [vmem:[#allocation3 + $0xd8] sm:$0xff]
    %v1095 = vld [vmem:[#allocation3 + $0xe0] sm:$0xff]
    %v1096 = vld [vmem:[#allocation3 + $0xe8] sm:$0xff]
    %v1097 = vld [vmem:[#allocation3 + $0xf0] sm:$0xff]
    %v1098 = vld [vmem:[#allocation3 + $0xf8] sm:$0xff]
    %v1099 = vld [vmem:[#allocation3 + $0x100] sm:$0xff]
    %v1100 = vld [vmem:[#allocation3 + $0x108] sm:$0xff]
    %v1101 = vld [vmem:[#allocation3 + $0x110] sm:$0xff]
    %v1102 = vld [vmem:[#allocation3 + $0x118] sm:$0xff]
    %v1103 = vld [vmem:[#allocation3 + $0x120] sm:$0xff]
    %v1104 = vld [vmem:[#allocation3 + $0x128] sm:$0xff]
    %v1105 = vld [vmem:[#allocation3 + $0x130] sm:$0xff]
    %v1106 = vld [vmem:[#allocation3 + $0x138] sm:$0xff]
    %v1107 = vld [vmem:[#allocation3 + $0x140] sm:$0xff]
    %v1108 = vld [vmem:[#allocation3 + $0x148] sm:$0xff]
    %v1109 = vld [vmem:[#allocation3 + $0x150] sm:$0xff]
    %v1110 = vld [vmem:[#allocation3 + $0x158] sm:$0xff]
    %v1111 = vld [vmem:[#allocation3 + $0x160] sm:$0xff]
    %v1112 = vld [vmem:[#allocation3 + $0x168] sm:$0xff]
    %v1113 = vld [vmem:[#allocation3 + $0x170] sm:$0xff]
    %v1114 = vld [vmem:[#allocation3 + $0x178] sm:$0xff]
    %1115 = vmatpush.msra.mxu0 %v1112
    %1116 = vmatpush.msra.mxu0 %v1109
    %1117 = vmatpush.msra.mxu0 %v1106
    %1118 = vmatpush.msra.mxu0 %v1103
    %1119 = vmatpush.msra.mxu0 %v1100
    %1120 = vmatpush.msra.mxu0 %v1097
    %1121 = vmatpush.msra.mxu0 %v1094
    %1122 = vmatpush.msra.mxu0 %v1091
    %1123 = vmatpush.msra.mxu0 %v1088
    %1124 = vmatpush.msra.mxu0 %v1085
    %1125 = vmatpush.msra.mxu0 %v1082
    %1126 = vmatpush.msra.mxu0 %v1079
    %1127 = vmatpush.msra.mxu0 %v1076
    %1128 = vmatpush.msra.mxu0 %v1073
    %1129 = vmatpush.msra.mxu0 %v1070
    %1130 = vmatpush.msra.mxu0 %v1067
    %1131 = vmatmul.f32.gmra.mxu0 %v1058
    %v1132 = vpop.f32.mrf.mxu0
    %v1133 = vadd.f32 0.0, %v1132
    %1134 = vdwg.mxu0
    %1135 = vmatpush.msra.mxu0 %v1113
    %1136 = vmatpush.msra.mxu0 %v1110
    %1137 = vmatpush.msra.mxu0 %v1107
    %1138 = vmatpush.msra.mxu0 %v1104
    %1139 = vmatpush.msra.mxu0 %v1101
    %1140 = vmatpush.msra.mxu0 %v1098
    %1141 = vmatpush.msra.mxu0 %v1095
    %1142 = vmatpush.msra.mxu0 %v1092
    %1143 = vmatpush.msra.mxu0 %v1089
    %1144 = vmatpush.msra.mxu0 %v1086
    %1145 = vmatpush.msra.mxu0 %v1083
    %1146 = vmatpush.msra.mxu0 %v1080
    %1147 = vmatpush.msra.mxu0 %v1077
    %1148 = vmatpush.msra.mxu0 %v1074
    %1149 = vmatpush.msra.mxu0 %v1071
    %1150 = vmatpush.msra.mxu0 %v1068
    %1151 = vmatmul.f32.gmra.mxu0 %v1058
    %v1152 = vpop.f32.mrf.mxu0
    %v1153 = vadd.f32 0.0, %v1152
    %1154 = vdwg.mxu0
    %1155 = vmatpush.msra.mxu0 %v1114
    %1156 = vmatpush.msra.mxu0 %v1111
    %1157 = vmatpush.msra.mxu0 %v1108
    %1158 = vmatpush.msra.mxu0 %v1105
    %1159 = vmatpush.msra.mxu0 %v1102
    %1160 = vmatpush.msra.mxu0 %v1099
    %1161 = vmatpush.msra.mxu0 %v1096
    %1162 = vmatpush.msra.mxu0 %v1093
    %1163 = vmatpush.msra.mxu0 %v1090
    %1164 = vmatpush.msra.mxu0 %v1087
    %1165 = vmatpush.msra.mxu0 %v1084
    %1166 = vmatpush.msra.mxu0 %v1081
    %1167 = vmatpush.msra.mxu0 %v1078
    %1168 = vmatpush.msra.mxu0 %v1075
    %1169 = vmatpush.msra.mxu0 %v1072
    %1170 = vmatpush.msra.mxu0 %v1069
    %1171 = vmatmul.f32.gmra.mxu0 %v1058
    %v1172 = vpop.f32.mrf.mxu0
    %v1173 = vadd.f32 0.0, %v1172
    %1174 = vdwg.mxu0
    %v1175 = vadd.f32 %v1064, %v1133
    %v1176 = vxor.u32 %v1175, 2147483648
    %v1177 = vmul.f32 %v1176, 1.442695
    %v1178 = vpow.pop %v1177
    %v1179 = vadd.f32 %v1178, 1.0
    %v1180 = vrcp.pop %v1179
    %v1181 = vmul.f32 %v1179, %v1180
    %v1182 = vsub.f32 1.0, %v1181
    %v1183 = vmul.f32 %v1180, %v1182
    %v1184 = vadd.f32 %v1180, %v1183
    %vm1185 = vweird.f32 %v1179
    %vm1186 = vweird.f32 %v1180
    %vm1187 = vmor %vm1185, %vm1186
    %v1188 = vsel %vm1187, %v1180, %v1184
    %v1189 = vand.u32 2147483647, %v1179
    %vm1190 = vcmp.eq.f32.partialorder %v1189, 8.507059e+37
    %v1191 = vand.u32 %v1179, 2147483648
    %v1192 = vor.u32 1.1754944e-38, %v1191
    %v1193 = vsel %vm1190, %v1192, %v1188
    %v1194 = vmul.f32 1.0, %v1193
    %v1195 = vadd.f32 %v1065, %v1153
    %v1196 = vxor.u32 %v1195, 2147483648
    %v1197 = vmul.f32 %v1196, 1.442695
    %v1198 = vpow.pop %v1197
    %v1199 = vadd.f32 %v1198, 1.0
    %v1200 = vrcp.pop %v1199
    %v1201 = vmul.f32 %v1199, %v1200
    %v1202 = vsub.f32 1.0, %v1201
    %v1203 = vmul.f32 %v1200, %v1202
    %v1204 = vadd.f32 %v1200, %v1203
    %vm1205 = vweird.f32 %v1199
    %vm1206 = vweird.f32 %v1200
    %vm1207 = vmor %vm1205, %vm1206
    %v1208 = vsel %vm1207, %v1200, %v1204
    %v1209 = vand.u32 2147483647, %v1199
    %vm1210 = vcmp.eq.f32.partialorder %v1209, 8.507059e+37
    %v1211 = vand.u32 %v1199, 2147483648
    %v1212 = vor.u32 1.1754944e-38, %v1211
    %v1213 = vsel %vm1210, %v1212, %v1208
    %v1214 = vmul.f32 1.0, %v1213
    %v1215 = vadd.f32 %v1173, %v240
    %v1216 = vmul.f32 %v1194, %v1215
    %v1217 = vadd.f32 %v1066, %v1216
    %v1218 = vtanh.pop %v1217
    %v1219 = vsub.f32 1.0, %v1214
    %v1220 = vmul.f32 %v1219, %v1218
    %v1221 = vmul.f32 %v1214, %v1058
    %v1222 = vadd.f32 %v1220, %v1221
    %s1223 = scalar_lea.vmem [#allocation6], 40
    %1224 = vst [vmem:[%s1223] sm:$0xff] %v1222
    %s1225 = smul.u32 6, 3
    %s1226 = smul.addr %s1225, 8
    %s1227 = scalar_lea.vmem [#allocation2], %s1226
    %v1228 = vld [vmem:[%s1227] sm:$0xff]
    %v1229 = vld [vmem:[%s1227 + $0x8] sm:$0xff]
    %v1230 = vld [vmem:[%s1227 + $0x10] sm:$0xff]
    %v1231 = vld [vmem:[#allocation3] sm:$0xff]
    %v1232 = vld [vmem:[#allocation3 + $0x8] sm:$0xff]
    %v1233 = vld [vmem:[#allocation3 + $0x10] sm:$0xff]
    %v1234 = vld [vmem:[#allocation3 + $0x18] sm:$0xff]
    %v1235 = vld [vmem:[#allocation3 + $0x20] sm:$0xff]
    %v1236 = vld [vmem:[#allocation3 + $0x28] sm:$0xff]
    %v1237 = vld [vmem:[#allocation3 + $0x30] sm:$0xff]
    %v1238 = vld [vmem:[#allocation3 + $0x38] sm:$0xff]
    %v1239 = vld [vmem:[#allocation3 + $0x40] sm:$0xff]
    %v1240 = vld [vmem:[#allocation3 + $0x48] sm:$0xff]
    %v1241 = vld [vmem:[#allocation3 + $0x50] sm:$0xff]
    %v1242 = vld [vmem:[#allocation3 + $0x58] sm:$0xff]
    %v1243 = vld [vmem:[#allocation3 + $0x60] sm:$0xff]
    %v1244 = vld [vmem:[#allocation3 + $0x68] sm:$0xff]
    %v1245 = vld [vmem:[#allocation3 + $0x70] sm:$0xff]
    %v1246 = vld [vmem:[#allocation3 + $0x78] sm:$0xff]
    %v1247 = vld [vmem:[#allocation3 + $0x80] sm:$0xff]
    %v1248 = vld [vmem:[#allocation3 + $0x88] sm:$0xff]
    %v1249 = vld [vmem:[#allocation3 + $0x90] sm:$0xff]
    %v1250 = vld [vmem:[#allocation3 + $0x98] sm:$0xff]
    %v1251 = vld [vmem:[#allocation3 + $0xa0] sm:$0xff]
    %v1252 = vld [vmem:[#allocation3 + $0xa8] sm:$0xff]
    %v1253 = vld [vmem:[#allocation3 + $0xb0] sm:$0xff]
    %v1254 = vld [vmem:[#allocation3 + $0xb8] sm:$0xff]
    %v1255 = vld [vmem:[#allocation3 + $0xc0] sm:$0xff]
    %v1256 = vld [vmem:[#allocation3 + $0xc8] sm:$0xff]
    %v1257 = vld [vmem:[#allocation3 + $0xd0] sm:$0xff]
    %v1258 = vld [vmem:[#allocation3 + $0xd8] sm:$0xff]
    %v1259 = vld [vmem:[#allocation3 + $0xe0] sm:$0xff]
    %v1260 = vld [vmem:[#allocation3 + $0xe8] sm:$0xff]
    %v1261 = vld [vmem:[#allocation3 + $0xf0] sm:$0xff]
    %v1262 = vld [vmem:[#allocation3 + $0xf8] sm:$0xff]
    %v1263 = vld [vmem:[#allocation3 + $0x100] sm:$0xff]
    %v1264 = vld [vmem:[#allocation3 + $0x108] sm:$0xff]
    %v1265 = vld [vmem:[#allocation3 + $0x110] sm:$0xff]
    %v1266 = vld [vmem:[#allocation3 + $0x118] sm:$0xff]
    %v1267 = vld [vmem:[#allocation3 + $0x120] sm:$0xff]
    %v1268 = vld [vmem:[#allocation3 + $0x128] sm:$0xff]
    %v1269 = vld [vmem:[#allocation3 + $0x130] sm:$0xff]
    %v1270 = vld [vmem:[#allocation3 + $0x138] sm:$0xff]
    %v1271 = vld [vmem:[#allocation3 + $0x140] sm:$0xff]
    %v1272 = vld [vmem:[#allocation3 + $0x148] sm:$0xff]
    %v1273 = vld [vmem:[#allocation3 + $0x150] sm:$0xff]
    %v1274 = vld [vmem:[#allocation3 + $0x158] sm:$0xff]
    %v1275 = vld [vmem:[#allocation3 + $0x160] sm:$0xff]
    %v1276 = vld [vmem:[#allocation3 + $0x168] sm:$0xff]
    %v1277 = vld [vmem:[#allocation3 + $0x170] sm:$0xff]
    %v1278 = vld [vmem:[#allocation3 + $0x178] sm:$0xff]
    %1279 = vmatpush.msra.mxu0 %v1276
    %1280 = vmatpush.msra.mxu0 %v1273
    %1281 = vmatpush.msra.mxu0 %v1270
    %1282 = vmatpush.msra.mxu0 %v1267
    %1283 = vmatpush.msra.mxu0 %v1264
    %1284 = vmatpush.msra.mxu0 %v1261
    %1285 = vmatpush.msra.mxu0 %v1258
    %1286 = vmatpush.msra.mxu0 %v1255
    %1287 = vmatpush.msra.mxu0 %v1252
    %1288 = vmatpush.msra.mxu0 %v1249
    %1289 = vmatpush.msra.mxu0 %v1246
    %1290 = vmatpush.msra.mxu0 %v1243
    %1291 = vmatpush.msra.mxu0 %v1240
    %1292 = vmatpush.msra.mxu0 %v1237
    %1293 = vmatpush.msra.mxu0 %v1234
    %1294 = vmatpush.msra.mxu0 %v1231
    %1295 = vmatmul.f32.gmra.mxu0 %v1222
    %v1296 = vpop.f32.mrf.mxu0
    %v1297 = vadd.f32 0.0, %v1296
    %1298 = vdwg.mxu0
    %1299 = vmatpush.msra.mxu0 %v1277
    %1300 = vmatpush.msra.mxu0 %v1274
    %1301 = vmatpush.msra.mxu0 %v1271
    %1302 = vmatpush.msra.mxu0 %v1268
    %1303 = vmatpush.msra.mxu0 %v1265
    %1304 = vmatpush.msra.mxu0 %v1262
    %1305 = vmatpush.msra.mxu0 %v1259
    %1306 = vmatpush.msra.mxu0 %v1256
    %1307 = vmatpush.msra.mxu0 %v1253
    %1308 = vmatpush.msra.mxu0 %v1250
    %1309 = vmatpush.msra.mxu0 %v1247
    %1310 = vmatpush.msra.mxu0 %v1244
    %1311 = vmatpush.msra.mxu0 %v1241
    %1312 = vmatpush.msra.mxu0 %v1238
    %1313 = vmatpush.msra.mxu0 %v1235
    %1314 = vmatpush.msra.mxu0 %v1232
    %1315 = vmatmul.f32.gmra.mxu0 %v1222
    %v1316 = vpop.f32.mrf.mxu0
    %v1317 = vadd.f32 0.0, %v1316
    %1318 = vdwg.mxu0
    %1319 = vmatpush.msra.mxu0 %v1278
    %1320 = vmatpush.msra.mxu0 %v1275
    %1321 = vmatpush.msra.mxu0 %v1272
    %1322 = vmatpush.msra.mxu0 %v1269
    %1323 = vmatpush.msra.mxu0 %v1266
    %1324 = vmatpush.msra.mxu0 %v1263
    %1325 = vmatpush.msra.mxu0 %v1260
    %1326 = vmatpush.msra.mxu0 %v1257
    %1327 = vmatpush.msra.mxu0 %v1254
    %1328 = vmatpush.msra.mxu0 %v1251
    %1329 = vmatpush.msra.mxu0 %v1248
    %1330 = vmatpush.msra.mxu0 %v1245
    %1331 = vmatpush.msra.mxu0 %v1242
    %1332 = vmatpush.msra.mxu0 %v1239
    %1333 = vmatpush.msra.mxu0 %v1236
    %1334 = vmatpush.msra.mxu0 %v1233
    %1335 = vmatmul.f32.gmra.mxu0 %v1222
    %v1336 = vpop.f32.mrf.mxu0
    %v1337 = vadd.f32 0.0, %v1336
    %1338 = vdwg.mxu0
    %v1339 = vadd.f32 %v1228, %v1297
    %v1340 = vxor.u32 %v1339, 2147483648
    %v1341 = vmul.f32 %v1340, 1.442695
    %v1342 = vpow.pop %v1341
    %v1343 = vadd.f32 %v1342, 1.0
    %v1344 = vrcp.pop %v1343
    %v1345 = vmul.f32 %v1343, %v1344
    %v1346 = vsub.f32 1.0, %v1345
    %v1347 = vmul.f32 %v1344, %v1346
    %v1348 = vadd.f32 %v1344, %v1347
    %vm1349 = vweird.f32 %v1343
    %vm1350 = vweird.f32 %v1344
    %vm1351 = vmor %vm1349, %vm1350
    %v1352 = vsel %vm1351, %v1344, %v1348
    %v1353 = vand.u32 2147483647, %v1343
    %vm1354 = vcmp.eq.f32.partialorder %v1353, 8.507059e+37
    %v1355 = vand.u32 %v1343, 2147483648
    %v1356 = vor.u32 1.1754944e-38, %v1355
    %v1357 = vsel %vm1354, %v1356, %v1352
    %v1358 = vmul.f32 1.0, %v1357
    %v1359 = vadd.f32 %v1229, %v1317
    %v1360 = vxor.u32 %v1359, 2147483648
    %v1361 = vmul.f32 %v1360, 1.442695
    %v1362 = vpow.pop %v1361
    %v1363 = vadd.f32 %v1362, 1.0
    %v1364 = vrcp.pop %v1363
    %v1365 = vmul.f32 %v1363, %v1364
    %v1366 = vsub.f32 1.0, %v1365
    %v1367 = vmul.f32 %v1364, %v1366
    %v1368 = vadd.f32 %v1364, %v1367
    %vm1369 = vweird.f32 %v1363
    %vm1370 = vweird.f32 %v1364
    %vm1371 = vmor %vm1369, %vm1370
    %v1372 = vsel %vm1371, %v1364, %v1368
    %v1373 = vand.u32 2147483647, %v1363
    %vm1374 = vcmp.eq.f32.partialorder %v1373, 8.507059e+37
    %v1375 = vand.u32 %v1363, 2147483648
    %v1376 = vor.u32 1.1754944e-38, %v1375
    %v1377 = vsel %vm1374, %v1376, %v1372
    %v1378 = vmul.f32 1.0, %v1377
    %v1379 = vadd.f32 %v1337, %v240
    %v1380 = vmul.f32 %v1358, %v1379
    %v1381 = vadd.f32 %v1230, %v1380
    %v1382 = vtanh.pop %v1381
    %v1383 = vsub.f32 1.0, %v1378
    %v1384 = vmul.f32 %v1383, %v1382
    %v1385 = vmul.f32 %v1378, %v1222
    %v1386 = vadd.f32 %v1384, %v1385
    %s1387 = scalar_lea.vmem [#allocation6], 48
    %1388 = vst [vmem:[%s1387] sm:$0xff] %v1386
    %s1389 = smul.u32 7, 3
    %s1390 = smul.addr %s1389, 8
    %s1391 = scalar_lea.vmem [#allocation2], %s1390
    %v1392 = vld [vmem:[%s1391] sm:$0xff]
    %v1393 = vld [vmem:[%s1391 + $0x8] sm:$0xff]
    %v1394 = vld [vmem:[%s1391 + $0x10] sm:$0xff]
    %v1395 = vld [vmem:[#allocation3] sm:$0xff]
    %v1396 = vld [vmem:[#allocation3 + $0x8] sm:$0xff]
    %v1397 = vld [vmem:[#allocation3 + $0x10] sm:$0xff]
    %v1398 = vld [vmem:[#allocation3 + $0x18] sm:$0xff]
    %v1399 = vld [vmem:[#allocation3 + $0x20] sm:$0xff]
    %v1400 = vld [vmem:[#allocation3 + $0x28] sm:$0xff]
    %v1401 = vld [vmem:[#allocation3 + $0x30] sm:$0xff]
    %v1402 = vld [vmem:[#allocation3 + $0x38] sm:$0xff]
    %v1403 = vld [vmem:[#allocation3 + $0x40] sm:$0xff]
    %v1404 = vld [vmem:[#allocation3 + $0x48] sm:$0xff]
    %v1405 = vld [vmem:[#allocation3 + $0x50] sm:$0xff]
    %v1406 = vld [vmem:[#allocation3 + $0x58] sm:$0xff]
    %v1407 = vld [vmem:[#allocation3 + $0x60] sm:$0xff]
    %v1408 = vld [vmem:[#allocation3 + $0x68] sm:$0xff]
    %v1409 = vld [vmem:[#allocation3 + $0x70] sm:$0xff]
    %v1410 = vld [vmem:[#allocation3 + $0x78] sm:$0xff]
    %v1411 = vld [vmem:[#allocation3 + $0x80] sm:$0xff]
    %v1412 = vld [vmem:[#allocation3 + $0x88] sm:$0xff]
    %v1413 = vld [vmem:[#allocation3 + $0x90] sm:$0xff]
    %v1414 = vld [vmem:[#allocation3 + $0x98] sm:$0xff]
    %v1415 = vld [vmem:[#allocation3 + $0xa0] sm:$0xff]
    %v1416 = vld [vmem:[#allocation3 + $0xa8] sm:$0xff]
    %v1417 = vld [vmem:[#allocation3 + $0xb0] sm:$0xff]
    %v1418 = vld [vmem:[#allocation3 + $0xb8] sm:$0xff]
    %v1419 = vld [vmem:[#allocation3 + $0xc0] sm:$0xff]
    %v1420 = vld [vmem:[#allocation3 + $0xc8] sm:$0xff]
    %v1421 = vld [vmem:[#allocation3 + $0xd0] sm:$0xff]
    %v1422 = vld [vmem:[#allocation3 + $0xd8] sm:$0xff]
    %v1423 = vld [vmem:[#allocation3 + $0xe0] sm:$0xff]
    %v1424 = vld [vmem:[#allocation3 + $0xe8] sm:$0xff]
    %v1425 = vld [vmem:[#allocation3 + $0xf0] sm:$0xff]
    %v1426 = vld [vmem:[#allocation3 + $0xf8] sm:$0xff]
    %v1427 = vld [vmem:[#allocation3 + $0x100] sm:$0xff]
    %v1428 = vld [vmem:[#allocation3 + $0x108] sm:$0xff]
    %v1429 = vld [vmem:[#allocation3 + $0x110] sm:$0xff]
    %v1430 = vld [vmem:[#allocation3 + $0x118] sm:$0xff]
    %v1431 = vld [vmem:[#allocation3 + $0x120] sm:$0xff]
    %v1432 = vld [vmem:[#allocation3 + $0x128] sm:$0xff]
    %v1433 = vld [vmem:[#allocation3 + $0x130] sm:$0xff]
    %v1434 = vld [vmem:[#allocation3 + $0x138] sm:$0xff]
    %v1435 = vld [vmem:[#allocation3 + $0x140] sm:$0xff]
    %v1436 = vld [vmem:[#allocation3 + $0x148] sm:$0xff]
    %v1437 = vld [vmem:[#allocation3 + $0x150] sm:$0xff]
    %v1438 = vld [vmem:[#allocation3 + $0x158] sm:$0xff]
    %v1439 = vld [vmem:[#allocation3 + $0x160] sm:$0xff]
    %v1440 = vld [vmem:[#allocation3 + $0x168] sm:$0xff]
    %v1441 = vld [vmem:[#allocation3 + $0x170] sm:$0xff]
    %v1442 = vld [vmem:[#allocation3 + $0x178] sm:$0xff]
    %1443 = vmatpush.msra.mxu0 %v1440
    %1444 = vmatpush.msra.mxu0 %v1437
    %1445 = vmatpush.msra.mxu0 %v1434
    %1446 = vmatpush.msra.mxu0 %v1431
    %1447 = vmatpush.msra.mxu0 %v1428
    %1448 = vmatpush.msra.mxu0 %v1425
    %1449 = vmatpush.msra.mxu0 %v1422
    %1450 = vmatpush.msra.mxu0 %v1419
    %1451 = vmatpush.msra.mxu0 %v1416
    %1452 = vmatpush.msra.mxu0 %v1413
    %1453 = vmatpush.msra.mxu0 %v1410
    %1454 = vmatpush.msra.mxu0 %v1407
    %1455 = vmatpush.msra.mxu0 %v1404
    %1456 = vmatpush.msra.mxu0 %v1401
    %1457 = vmatpush.msra.mxu0 %v1398
    %1458 = vmatpush.msra.mxu0 %v1395
    %1459 = vmatmul.f32.gmra.mxu0 %v1386
    %v1460 = vpop.f32.mrf.mxu0
    %v1461 = vadd.f32 0.0, %v1460
    %1462 = vdwg.mxu0
    %1463 = vmatpush.msra.mxu0 %v1441
    %1464 = vmatpush.msra.mxu0 %v1438
    %1465 = vmatpush.msra.mxu0 %v1435
    %1466 = vmatpush.msra.mxu0 %v1432
    %1467 = vmatpush.msra.mxu0 %v1429
    %1468 = vmatpush.msra.mxu0 %v1426
    %1469 = vmatpush.msra.mxu0 %v1423
    %1470 = vmatpush.msra.mxu0 %v1420
    %1471 = vmatpush.msra.mxu0 %v1417
    %1472 = vmatpush.msra.mxu0 %v1414
    %1473 = vmatpush.msra.mxu0 %v1411
    %1474 = vmatpush.msra.mxu0 %v1408
    %1475 = vmatpush.msra.mxu0 %v1405
    %1476 = vmatpush.msra.mxu0 %v1402
    %1477 = vmatpush.msra.mxu0 %v1399
    %1478 = vmatpush.msra.mxu0 %v1396
    %1479 = vmatmul.f32.gmra.mxu0 %v1386
    %v1480 = vpop.f32.mrf.mxu0
    %v1481 = vadd.f32 0.0, %v1480
    %1482 = vdwg.mxu0
    %1483 = vmatpush.msra.mxu0 %v1442
    %1484 = vmatpush.msra.mxu0 %v1439
    %1485 = vmatpush.msra.mxu0 %v1436
    %1486 = vmatpush.msra.mxu0 %v1433
    %1487 = vmatpush.msra.mxu0 %v1430
    %1488 = vmatpush.msra.mxu0 %v1427
    %1489 = vmatpush.msra.mxu0 %v1424
    %1490 = vmatpush.msra.mxu0 %v1421
    %1491 = vmatpush.msra.mxu0 %v1418
    %1492 = vmatpush.msra.mxu0 %v1415
    %1493 = vmatpush.msra.mxu0 %v1412
    %1494 = vmatpush.msra.mxu0 %v1409
    %1495 = vmatpush.msra.mxu0 %v1406
    %1496 = vmatpush.msra.mxu0 %v1403
    %1497 = vmatpush.msra.mxu0 %v1400
    %1498 = vmatpush.msra.mxu0 %v1397
    %1499 = vmatmul.f32.gmra.mxu0 %v1386
    %v1500 = vpop.f32.mrf.mxu0
    %v1501 = vadd.f32 0.0, %v1500
    %1502 = vdwg.mxu0
    %v1503 = vadd.f32 %v1392, %v1461
    %v1504 = vxor.u32 %v1503, 2147483648
    %v1505 = vmul.f32 %v1504, 1.442695
    %v1506 = vpow.pop %v1505
    %v1507 = vadd.f32 %v1506, 1.0
    %v1508 = vrcp.pop %v1507
    %v1509 = vmul.f32 %v1507, %v1508
    %v1510 = vsub.f32 1.0, %v1509
    %v1511 = vmul.f32 %v1508, %v1510
    %v1512 = vadd.f32 %v1508, %v1511
    %vm1513 = vweird.f32 %v1507
    %vm1514 = vweird.f32 %v1508
    %vm1515 = vmor %vm1513, %vm1514
    %v1516 = vsel %vm1515, %v1508, %v1512
    %v1517 = vand.u32 2147483647, %v1507
    %vm1518 = vcmp.eq.f32.partialorder %v1517, 8.507059e+37
    %v1519 = vand.u32 %v1507, 2147483648
    %v1520 = vor.u32 1.1754944e-38, %v1519
    %v1521 = vsel %vm1518, %v1520, %v1516
    %v1522 = vmul.f32 1.0, %v1521
    %v1523 = vadd.f32 %v1393, %v1481
    %v1524 = vxor.u32 %v1523, 2147483648
    %v1525 = vmul.f32 %v1524, 1.442695
    %v1526 = vpow.pop %v1525
    %v1527 = vadd.f32 %v1526, 1.0
    %v1528 = vrcp.pop %v1527
    %v1529 = vmul.f32 %v1527, %v1528
    %v1530 = vsub.f32 1.0, %v1529
    %v1531 = vmul.f32 %v1528, %v1530
    %v1532 = vadd.f32 %v1528, %v1531
    %vm1533 = vweird.f32 %v1527
    %vm1534 = vweird.f32 %v1528
    %vm1535 = vmor %vm1533, %vm1534
    %v1536 = vsel %vm1535, %v1528, %v1532
    %v1537 = vand.u32 2147483647, %v1527
    %vm1538 = vcmp.eq.f32.partialorder %v1537, 8.507059e+37
    %v1539 = vand.u32 %v1527, 2147483648
    %v1540 = vor.u32 1.1754944e-38, %v1539
    %v1541 = vsel %vm1538, %v1540, %v1536
    %v1542 = vmul.f32 1.0, %v1541
    %v1543 = vadd.f32 %v1501, %v240
    %v1544 = vmul.f32 %v1522, %v1543
    %v1545 = vadd.f32 %v1394, %v1544
    %v1546 = vtanh.pop %v1545
    %v1547 = vsub.f32 1.0, %v1542
    %v1548 = vmul.f32 %v1547, %v1546
    %v1549 = vmul.f32 %v1542, %v1386
    %v1550 = vadd.f32 %v1548, %v1549
    %s1551 = scalar_lea.vmem [#allocation6], 56
    %1552 = vst [vmem:[%s1551] sm:$0xff] %v1550
    // Predicated region
    $region26: #{tpu_custom_call.1} parent=1 // pred_check
      _
    $region27: #{tpu_custom_call.1} parent=1 // pred_check_branch
      %1554 = sbr.rel (0) target = $region29
    $region28: #{tpu_custom_call.1} parent=1 // pred_region
      %1556 = vsyncadd [#allocation5], 0
      %s1557 = sshll.u32 [#allocation6], 4
      %s1558 = int_to_ptr.vmem [resolvable:$true] %s1557
      %s1559 = sshll.u32 %s5, 4
      %s1560 = int_to_ptr.hbm [resolvable:$true] %s1559
      %1565 = dma.vmem_to_hbm [thread:$0]  %s1558, 1024, %s1560, [#allocation5], 128, 128, 8
    $region29: #{tpu_custom_call.1} parent=1 // pred_fallthru
      _
    // Predicated region
    $region30: #{tpu_custom_call.1} parent=1 // pred_check
      _
    $region31: #{tpu_custom_call.1} parent=1 // pred_check_branch
      %1567 = sbr.rel (0) target = $region33
    $region32: #{tpu_custom_call.1} parent=1 // pred_region
      %1569 = dma.done [#allocation5], 1024
    $region33: #{tpu_custom_call.1} parent=1 // pred_fallthru
      _
    %1570 = vsyncpa [#allocation4], 1
    %1571 = vsyncpa [#allocation5], 1

</llo_original>
